<compile_context>
chip_gen: v6e
topology: v6e:2x2x1
jax: 0.10.0
libtpu: 0.0.40
codegen_flags: <defaults>
</compile_context>

<pallas_src>
import jax
import jax.numpy as jnp
import numpy as np
from jax import lax
from jax.experimental import pallas as pl
from jax.experimental.pallas import tpu as pltpu

LANE = 128
SUBLANE = 8


def _round_up(x, m):
    return ((x + m - 1) // m) * m


def _largest_divisor_leq(n, k):
    k = max(1, min(k, n))
    while n % k:
        k -= 1
    return k


# ---------------------------------------------------------------------------
# Kernel
# ---------------------------------------------------------------------------
def lstm_fc_kernel(x_ref, wih_ref, whh_ref, b_ref, fcw_ref, fcb_ref,
                   out_ref, h_scr, c_scr, proj_scr):
    """One (batch-tile, time-chunk) grid step of the LSTM + FC head.

    x_ref    : (Tc, Bt, Ep)    time-major embedded inputs for this chunk
    wih_ref  : (Ep, 4*Hp)      input-to-hidden weights (gate-major, padded)
    whh_ref  : (Hp, 4*Hp)      hidden-to-hidden weights (gate-major, padded)
    b_ref    : (1, 4*Hp)       combined bias (b_ih + b_hh)
    fcw_ref  : (Hp, 128)       FC weights, zero-padded to a lane-dense block
    fcb_ref  : (1, 128)        FC bias, zero-padded
    out_ref  : (Bt, 128)       lane-dense logits block (cols 0..1 are real)
    h_scr    : (Bt, Hp)        hidden state (persists across time chunks)
    c_scr    : (Bt, Hp)        cell state   (persists across time chunks)
    proj_scr : (Tc*Bt, 4*Hp)   precomputed x@W_ih + bias for this chunk
    """
    Tc, Bt, Ep = x_ref.shape
    Hp = h_scr.shape[1]
    t_chunk = pl.program_id(1)
    n_chunks = pl.num_programs(1)

    @pl.when(t_chunk == 0)
    def _init():
        h_scr[...] = jnp.zeros_like(h_scr)
        c_scr[...] = jnp.zeros_like(c_scr)

    # Hoisted input projection: one big MXU matmul for the whole chunk,
    # bias broadcast added once (not once per timestep).
    x_flat = x_ref[...].reshape(Tc * Bt, Ep)
    proj_scr[...] = (jnp.dot(x_flat, wih_ref[...],
                             preferred_element_type=jnp.float32)
                     + b_ref[...])

    # Hoist loop-invariant recurrent weight load out of the time loop.
    whh = whh_ref[...]

    def step(tau, carry):
        row0 = pl.multiple_of(tau * Bt, Bt)
        p_t = proj_scr[pl.ds(row0, Bt), :]                       # (Bt, 4Hp)
        gates = p_t + jnp.dot(h_scr[...], whh,
                              preferred_element_type=jnp.float32)
        # Gate-major, lane-aligned slabs (Hp is a multiple of 128).
        i_g = jax.nn.sigmoid(gates[:, 0 * Hp:1 * Hp])
        f_g = jax.nn.sigmoid(gates[:, 1 * Hp:2 * Hp])
        g_g = jnp.tanh(gates[:, 2 * Hp:3 * Hp])
        o_g = jax.nn.sigmoid(gates[:, 3 * Hp:4 * Hp])
        c_new = f_g * c_scr[...] + i_g * g_g
        h_new = o_g * jnp.tanh(c_new)
        c_scr[...] = c_new
        h_scr[...] = h_new
        return carry

    # Short static trip count -> unroll for LLO scheduling visibility.
    lax.fori_loop(0, Tc, step, 0, unroll=True)

    @pl.when(t_chunk == n_chunks - 1)
    def _finalize():
        # Lane-dense FC head; real logits occupy columns [0, 2).
        out_ref[...] = (jnp.dot(h_scr[...], fcw_ref[...],
                                preferred_element_type=jnp.float32)
                        + fcb_ref[...])


# ---------------------------------------------------------------------------
# Parameter init (PyTorch layout) and MXU-friendly packing
# ---------------------------------------------------------------------------
def init_raw_params(key, vocab_size, embed_dim, hidden_dim):
    ks = jax.random.split(key, 7)
    bound = 1.0 / np.sqrt(hidden_dim)
    embedding = jax.random.normal(ks[0], (vocab_size, embed_dim), jnp.float32)
    embedding = embedding.at[0].set(0.0)          # padding_idx=0
    w_ih = jax.random.uniform(ks[1], (4 * hidden_dim, embed_dim),
                              jnp.float32, -bound, bound)
    w_hh = jax.random.uniform(ks[2], (4 * hidden_dim, hidden_dim),
                              jnp.float32, -bound, bound)
    b_ih = jax.random.uniform(ks[3], (4 * hidden_dim,), jnp.float32,
                              -bound, bound)
    b_hh = jax.random.uniform(ks[4], (4 * hidden_dim,), jnp.float32,
                              -bound, bound)
    fc_w = jax.random.uniform(ks[5], (2, hidden_dim), jnp.float32,
                              -bound, bound)
    fc_b = jax.random.uniform(ks[6], (2,), jnp.float32, -bound, bound)
    return dict(embedding=embedding, w_ih=w_ih, w_hh=w_hh,
                b_ih=b_ih, b_hh=b_hh, fc_w=fc_w, fc_b=fc_b)


def pack_params(raw):
    """Pad E/H to lane multiples, gate-major weight packing, lane-dense FC."""
    V, E = raw["embedding"].shape
    H = raw["w_hh"].shape[1]
    Ep = _round_up(E, LANE)
    Hp = _round_up(H, LANE)

    emb_p = jnp.zeros((V, Ep), jnp.float32).at[:, :E].set(raw["embedding"])

    # PyTorch gate order [i, f, g, o]; split per-gate, pad each gate block.
    w_ih_g = raw["w_ih"].reshape(4, H, E)
    w_hh_g = raw["w_hh"].reshape(4, H, H)
    b_g = (raw["b_ih"] + raw["b_hh"]).reshape(4, H)

    w_ih_p = jnp.zeros((4, Hp, Ep), jnp.float32).at[:, :H, :E].set(w_ih_g)
    w_hh_p = jnp.zeros((4, Hp, Hp), jnp.float32).at[:, :H, :H].set(w_hh_g)
    b_p = jnp.zeros((4, Hp), jnp.float32).at[:, :H].set(b_g)

    # Transpose for right-multiplication: (in_dim, 4, Hp) -> (in_dim, 4*Hp).
    w_ih_t = jnp.transpose(w_ih_p, (2, 0, 1)).reshape(Ep, 4 * Hp)
    w_hh_t = jnp.transpose(w_hh_p, (2, 0, 1)).reshape(Hp, 4 * Hp)
    bias = b_p.reshape(1, 4 * Hp)

    fc_w_t = jnp.zeros((Hp, LANE), jnp.float32).at[:H, :2].set(raw["fc_w"].T)
    fc_b = jnp.zeros((1, LANE), jnp.float32).at[0, :2].set(raw["fc_b"])

    return dict(embedding=emb_p, w_ih_t=w_ih_t, w_hh_t=w_hh_t, bias=bias,
                fc_w_t=fc_w_t, fc_b=fc_b)


# ---------------------------------------------------------------------------
# Wrapper
# ---------------------------------------------------------------------------
def rnn_classifier_forward(tokens, packed, *, time_chunk=8, batch_tile=None):
    """tokens: (B, S) int32 -> logits (B, 2) f32."""
    emb = packed["embedding"]            # (V, Ep)
    wih = packed["w_ih_t"]               # (Ep, 4Hp)
    whh = packed["w_hh_t"]               # (Hp, 4Hp)
    bias = packed["bias"]                # (1, 4Hp)
    fcw = packed["fc_w_t"]               # (Hp, 128)
    fcb = packed["fc_b"]                 # (1, 128)

    B, S = tokens.shape
    Ep = emb.shape[1]
    Hp = whh.shape[0]
    G = whh.shape[1]                     # 4*Hp

    # Batch padding (f32 sublane = 8); padded rows use token 0 (padding_idx,
    # zero embedding) and are sliced away after the kernel.
    Bp = _round_up(max(B, SUBLANE), SUBLANE)
    if batch_tile is None:
        batch_tile = min(Bp, 128)
    batch_tile = _round_up(batch_tile, SUBLANE)
    Bp = _round_up(Bp, batch_tile)
    n_btiles = Bp // batch_tile

    # Time chunk must divide S exactly (padding extra timesteps would change
    # the LSTM result, since PyTorch still runs the cell on padding tokens).
    Tc = _largest_divisor_leq(S, time_chunk)
    n_tchunks = S // Tc

    # TODO(synk): embedding lookup stays as a jnp.take gather in the wrapper
    # (no clean rectangular-BlockSpec equivalent); done directly in time-major
    # order so no extra full HBM transpose of the activations is needed.
    tok_p = jnp.zeros((Bp, S), tokens.dtype).at[:B, :].set(tokens)
    x_tm = jnp.take(emb, tok_p.T, axis=0)          # (S, Bp, Ep) time-major

    out_padded = pl.pallas_call(
        lstm_fc_kernel,
        out_shape=jax.ShapeDtypeStruct((Bp, LANE), jnp.float32),
        grid=(n_btiles, n_tchunks),
        in_specs=[
            pl.BlockSpec((Tc, batch_tile, Ep), lambda b, t: (t, b, 0)),
            pl.BlockSpec((Ep, G), lambda b, t: (0, 0)),
            pl.BlockSpec((Hp, G), lambda b, t: (0, 0)),
            pl.BlockSpec((1, G), lambda b, t: (0, 0)),
            pl.BlockSpec((Hp, LANE), lambda b, t: (0, 0)),
            pl.BlockSpec((1, LANE), lambda b, t: (0, 0)),
        ],
        out_specs=pl.BlockSpec((batch_tile, LANE), lambda b, t: (b, 0)),
        scratch_shapes=[
            pltpu.VMEM((batch_tile, Hp), jnp.float32),        # h state
            pltpu.VMEM((batch_tile, Hp), jnp.float32),        # c state
            pltpu.VMEM((Tc * batch_tile, G), jnp.float32),    # x@W_ih + bias
        ],
        compiler_params=pltpu.CompilerParams(
            dimension_semantics=("parallel", "arbitrary"),
            vmem_limit_bytes=32 * 1024 * 1024,
        ),
    )(x_tm, wih, whh, bias, fcw, fcb)

    return out_padded[:B, :2]


# ---------------------------------------------------------------------------
# Pure-JAX reference (mirrors nn.Embedding + nn.LSTM + nn.Linear)
# ---------------------------------------------------------------------------
def reference_forward(tokens, raw):
    emb = jnp.take(raw["embedding"], tokens, axis=0)   # (B, S, E)
    B, S, E = emb.shape
    H = raw["w_hh"].shape[1]
    w_ih_t = raw["w_ih"].T
    w_hh_t = raw["w_hh"].T
    bias = (raw["b_ih"] + raw["b_hh"]).reshape(1, 4 * H)
    h = jnp.zeros((B, H), jnp.float32)
    c = jnp.zeros((B, H), jnp.float32)
    for t in range(S):
        gates = emb[:, t, :] @ w_ih_t + h @ w_hh_t + bias
        i_g = jax.nn.sigmoid(gates[:, 0 * H:1 * H])
        f_g = jax.nn.sigmoid(gates[:, 1 * H:2 * H])
        g_g = jnp.tanh(gates[:, 2 * H:3 * H])
        o_g = jax.nn.sigmoid(gates[:, 3 * H:4 * H])
        c = f_g * c + i_g * g_g
        h = o_g * jnp.tanh(c)
    return h @ raw["fc_w"].T + raw["fc_b"]


if __name__ == "__main__":
    # Small config consistent with the module defaults (embed/hidden = 128).
    vocab_size = 50
    embed_dim = 128
    hidden_dim = 128
    batch = 2
    seq_len = 8

    key = jax.random.PRNGKey(0)
    k_params, k_tokens = jax.random.split(key)
    raw = init_raw_params(k_params, vocab_size, embed_dim, hidden_dim)
    packed = pack_params(raw)
    tokens = jax.random.randint(k_tokens, (batch, seq_len), 0, vocab_size,
                                dtype=jnp.int32)

    logits = rnn_classifier_forward(tokens, packed)
    logits = jax.block_until_ready(logits)

    ref = reference_forward(tokens, raw)
    np.testing.assert_allclose(np.asarray(logits), np.asarray(ref),
                               rtol=1e-3, atol=2e-3)

    print("KERNEL_OK")
</pallas_src>

<mosaic_0001>
module attributes {stable_mosaic.version = 11 : i64} {
  func.func @lstm_fc_kernel(%arg0: i32, %arg1: i32, %arg2: memref<8x8x128xf32, #tpu.memory_space<vmem>>, %arg3: memref<128x512xf32, #tpu.memory_space<vmem>>, %arg4: memref<128x512xf32, #tpu.memory_space<vmem>>, %arg5: memref<1x512xf32, #tpu.memory_space<vmem>>, %arg6: memref<128x128xf32, #tpu.memory_space<vmem>>, %arg7: memref<1x128xf32, #tpu.memory_space<vmem>>, %arg8: memref<8x128xf32, #tpu.memory_space<vmem>>, %arg9: memref<8x128xf32, #tpu.memory_space<vmem>>, %arg10: memref<8x128xf32, #tpu.memory_space<vmem>>, %arg11: memref<64x512xf32, #tpu.memory_space<vmem>>) attributes {dimension_semantics = [#tpu.dimension_semantics<parallel>, #tpu.dimension_semantics<arbitrary>], iteration_bounds = array<i64: 1, 1>, scalar_prefetch = 0 : i64, scratch_operands = 3 : i64, tpu.core_type = #tpu.core_type<tc>, window_params = [{transform_indices = @transform_0, window_bounds = array<i64: 8, 8, 128>}, {pipeline_mode = #tpu.pipeline_mode<synchronous>, transform_indices = @transform_1, window_bounds = array<i64: 128, 512>}, {pipeline_mode = #tpu.pipeline_mode<synchronous>, transform_indices = @transform_2, window_bounds = array<i64: 128, 512>}, {pipeline_mode = #tpu.pipeline_mode<synchronous>, transform_indices = @transform_3, window_bounds = array<i64: 1, 512>}, {pipeline_mode = #tpu.pipeline_mode<synchronous>, transform_indices = @transform_4, window_bounds = array<i64: 128, 128>}, {pipeline_mode = #tpu.pipeline_mode<synchronous>, transform_indices = @transform_5, window_bounds = array<i64: 1, 128>}, {transform_indices = @transform_6, window_bounds = array<i64: 8, 128>}]} {
    %c0_i32 = arith.constant 0 : i32
    %0 = arith.cmpi eq, %arg1, %c0_i32 : i32
    %1 = arith.extui %0 : i1 to i32
    %c0_i32_0 = arith.constant 0 : i32
    %2 = arith.cmpi ne, %1, %c0_i32_0 : i32
    scf.if %2 {
      %cst_126 = arith.constant 0.000000e+00 : f32
      %295 = vector.broadcast %cst_126 : f32 to vector<8x128xf32>
      %c0_127 = arith.constant 0 : index
      %c0_128 = arith.constant 0 : index
      %296 = vector.load %arg9[%c0_127, %c0_128] : memref<8x128xf32, #tpu.memory_space<vmem>>, vector<8x128xf32>
      tpu.vector_store %arg9[%c0_127, %c0_128], %295 {strides = array<i32>} : memref<8x128xf32, #tpu.memory_space<vmem>>, vector<8x128xf32>,
      %cst_129 = arith.constant 0.000000e+00 : f32
      %297 = vector.broadcast %cst_129 : f32 to vector<8x128xf32>
      %c0_130 = arith.constant 0 : index
      %c0_131 = arith.constant 0 : index
      %298 = vector.load %arg10[%c0_130, %c0_131] : memref<8x128xf32, #tpu.memory_space<vmem>>, vector<8x128xf32>
      tpu.vector_store %arg10[%c0_130, %c0_131], %297 {strides = array<i32>} : memref<8x128xf32, #tpu.memory_space<vmem>>, vector<8x128xf32>,
    } else {
    }
    %c0 = arith.constant 0 : index
    %c0_1 = arith.constant 0 : index
    %c0_2 = arith.constant 0 : index
    %3 = vector.load %arg2[%c0, %c0_1, %c0_2] : memref<8x8x128xf32, #tpu.memory_space<vmem>>, vector<8x8x128xf32>
    %4 = vector.shape_cast %3 : vector<8x8x128xf32> to vector<64x128xf32>
    %c0_3 = arith.constant 0 : index
    %c0_4 = arith.constant 0 : index
    %5 = vector.load %arg3[%c0_3, %c0_4] : memref<128x512xf32, #tpu.memory_space<vmem>>, vector<128x512xf32>
    %cst = arith.constant dense<0.000000e+00> : vector<64x512xf32>
    %6 = tpu.matmul %4, %5, %cst {dimension_numbers = #tpu.dot_dimension_numbers<[1], [0], [0], [1], [0, 0, 1, 1], [], []>} : vector<64x128xf32>, vector<128x512xf32>, vector<64x512xf32> -> vector<64x512xf32>
    %c0_5 = arith.constant 0 : index
    %c0_6 = arith.constant 0 : index
    %7 = vector.load %arg5[%c0_5, %c0_6] : memref<1x512xf32, #tpu.memory_space<vmem>>, vector<1x512xf32>
    %8 = vector.broadcast %7 : vector<1x512xf32> to vector<64x512xf32>
    %9 = arith.addf %6, %8 : vector<64x512xf32>
    %c0_7 = arith.constant 0 : index
    %c0_8 = arith.constant 0 : index
    %10 = vector.load %arg11[%c0_7, %c0_8] : memref<64x512xf32, #tpu.memory_space<vmem>>, vector<64x512xf32>
    tpu.vector_store %arg11[%c0_7, %c0_8], %9 {strides = array<i32>} : memref<64x512xf32, #tpu.memory_space<vmem>>, vector<64x512xf32>,
    %c0_9 = arith.constant 0 : index
    %c0_10 = arith.constant 0 : index
    %11 = vector.load %arg4[%c0_9, %c0_10] : memref<128x512xf32, #tpu.memory_space<vmem>>, vector<128x512xf32>
    %c0_i32_11 = arith.constant 0 : i32
    %c8_i32 = arith.constant 8 : i32
    %12 = arith.muli %c0_i32_11, %c8_i32 : i32
    %13 = tpu.assume_multiple %12, 8 : i32
    %14 = arith.index_cast %13 : i32 to index
    %c0_12 = arith.constant 0 : index
    %15 = vector.load %arg11[%14, %c0_12] : memref<64x512xf32, #tpu.memory_space<vmem>>, vector<8x512xf32>
    %c0_13 = arith.constant 0 : index
    %c0_14 = arith.constant 0 : index
    %16 = vector.load %arg9[%c0_13, %c0_14] : memref<8x128xf32, #tpu.memory_space<vmem>>, vector<8x128xf32>
    %cst_15 = arith.constant dense<0.000000e+00> : vector<8x512xf32>
    %17 = tpu.matmul %16, %11, %cst_15 {dimension_numbers = #tpu.dot_dimension_numbers<[1], [0], [0], [1], [0, 0, 1, 1], [], []>} : vector<8x128xf32>, vector<128x512xf32>, vector<8x512xf32> -> vector<8x512xf32>
    %18 = arith.addf %15, %17 : vector<8x512xf32>
    %19 = vector.extract_strided_slice %18 {offsets = [0, 0], sizes = [8, 128], strides = [1, 1]} : vector<8x512xf32> to vector<8x128xf32>
    %20 = arith.negf %19 : vector<8x128xf32>
    %21 = math.exp %20 : vector<8x128xf32>
    %cst_16 = arith.constant 1.000000e+00 : f32
    %22 = vector.broadcast %cst_16 : f32 to vector<8x128xf32>
    %23 = arith.addf %22, %21 : vector<8x128xf32>
    %24 = arith.divf %22, %23 : vector<8x128xf32>
    %25 = vector.extract_strided_slice %18 {offsets = [0, 128], sizes = [8, 128], strides = [1, 1]} : vector<8x512xf32> to vector<8x128xf32>
    %26 = arith.negf %25 : vector<8x128xf32>
    %27 = math.exp %26 : vector<8x128xf32>
    %cst_17 = arith.constant 1.000000e+00 : f32
    %28 = vector.broadcast %cst_17 : f32 to vector<8x128xf32>
    %29 = arith.addf %28, %27 : vector<8x128xf32>
    %30 = arith.divf %28, %29 : vector<8x128xf32>
    %31 = vector.extract_strided_slice %18 {offsets = [0, 256], sizes = [8, 128], strides = [1, 1]} : vector<8x512xf32> to vector<8x128xf32>
    %32 = math.tanh %31 : vector<8x128xf32>
    %33 = vector.extract_strided_slice %18 {offsets = [0, 384], sizes = [8, 128], strides = [1, 1]} : vector<8x512xf32> to vector<8x128xf32>
    %34 = arith.negf %33 : vector<8x128xf32>
    %35 = math.exp %34 : vector<8x128xf32>
    %cst_18 = arith.constant 1.000000e+00 : f32
    %36 = vector.broadcast %cst_18 : f32 to vector<8x128xf32>
    %37 = arith.addf %36, %35 : vector<8x128xf32>
    %38 = arith.divf %36, %37 : vector<8x128xf32>
    %c0_19 = arith.constant 0 : index
    %c0_20 = arith.constant 0 : index
    %39 = vector.load %arg10[%c0_19, %c0_20] : memref<8x128xf32, #tpu.memory_space<vmem>>, vector<8x128xf32>
    %40 = arith.mulf %30, %39 : vector<8x128xf32>
    %41 = arith.mulf %24, %32 : vector<8x128xf32>
    %42 = arith.addf %40, %41 : vector<8x128xf32>
    %43 = math.tanh %42 : vector<8x128xf32>
    %44 = arith.mulf %38, %43 : vector<8x128xf32>
    %c0_21 = arith.constant 0 : index
    %c0_22 = arith.constant 0 : index
    %45 = vector.load %arg10[%c0_21, %c0_22] : memref<8x128xf32, #tpu.memory_space<vmem>>, vector<8x128xf32>
    tpu.vector_store %arg10[%c0_21, %c0_22], %42 {strides = array<i32>} : memref<8x128xf32, #tpu.memory_space<vmem>>, vector<8x128xf32>,
    %c0_23 = arith.constant 0 : index
    %c0_24 = arith.constant 0 : index
    %46 = vector.load %arg9[%c0_23, %c0_24] : memref<8x128xf32, #tpu.memory_space<vmem>>, vector<8x128xf32>
    tpu.vector_store %arg9[%c0_23, %c0_24], %44 {strides = array<i32>} : memref<8x128xf32, #tpu.memory_space<vmem>>, vector<8x128xf32>,
    %c1_i32 = arith.constant 1 : i32
    %c8_i32_25 = arith.constant 8 : i32
    %47 = arith.muli %c1_i32, %c8_i32_25 : i32
    %48 = tpu.assume_multiple %47, 8 : i32
    %49 = arith.index_cast %48 : i32 to index
    %c0_26 = arith.constant 0 : index
    %50 = vector.load %arg11[%49, %c0_26] : memref<64x512xf32, #tpu.memory_space<vmem>>, vector<8x512xf32>
    %c0_27 = arith.constant 0 : index
    %c0_28 = arith.constant 0 : index
    %51 = vector.load %arg9[%c0_27, %c0_28] : memref<8x128xf32, #tpu.memory_space<vmem>>, vector<8x128xf32>
    %cst_29 = arith.constant dense<0.000000e+00> : vector<8x512xf32>
    %52 = tpu.matmul %51, %11, %cst_29 {dimension_numbers = #tpu.dot_dimension_numbers<[1], [0], [0], [1], [0, 0, 1, 1], [], []>} : vector<8x128xf32>, vector<128x512xf32>, vector<8x512xf32> -> vector<8x512xf32>
    %53 = arith.addf %50, %52 : vector<8x512xf32>
    %54 = vector.extract_strided_slice %53 {offsets = [0, 0], sizes = [8, 128], strides = [1, 1]} : vector<8x512xf32> to vector<8x128xf32>
    %55 = arith.negf %54 : vector<8x128xf32>
    %56 = math.exp %55 : vector<8x128xf32>
    %cst_30 = arith.constant 1.000000e+00 : f32
    %57 = vector.broadcast %cst_30 : f32 to vector<8x128xf32>
    %58 = arith.addf %57, %56 : vector<8x128xf32>
    %59 = arith.divf %57, %58 : vector<8x128xf32>
    %60 = vector.extract_strided_slice %53 {offsets = [0, 128], sizes = [8, 128], strides = [1, 1]} : vector<8x512xf32> to vector<8x128xf32>
    %61 = arith.negf %60 : vector<8x128xf32>
    %62 = math.exp %61 : vector<8x128xf32>
    %cst_31 = arith.constant 1.000000e+00 : f32
    %63 = vector.broadcast %cst_31 : f32 to vector<8x128xf32>
    %64 = arith.addf %63, %62 : vector<8x128xf32>
    %65 = arith.divf %63, %64 : vector<8x128xf32>
    %66 = vector.extract_strided_slice %53 {offsets = [0, 256], sizes = [8, 128], strides = [1, 1]} : vector<8x512xf32> to vector<8x128xf32>
    %67 = math.tanh %66 : vector<8x128xf32>
    %68 = vector.extract_strided_slice %53 {offsets = [0, 384], sizes = [8, 128], strides = [1, 1]} : vector<8x512xf32> to vector<8x128xf32>
    %69 = arith.negf %68 : vector<8x128xf32>
    %70 = math.exp %69 : vector<8x128xf32>
    %cst_32 = arith.constant 1.000000e+00 : f32
    %71 = vector.broadcast %cst_32 : f32 to vector<8x128xf32>
    %72 = arith.addf %71, %70 : vector<8x128xf32>
    %73 = arith.divf %71, %72 : vector<8x128xf32>
    %c0_33 = arith.constant 0 : index
    %c0_34 = arith.constant 0 : index
    %74 = vector.load %arg10[%c0_33, %c0_34] : memref<8x128xf32, #tpu.memory_space<vmem>>, vector<8x128xf32>
    %75 = arith.mulf %65, %74 : vector<8x128xf32>
    %76 = arith.mulf %59, %67 : vector<8x128xf32>
    %77 = arith.addf %75, %76 : vector<8x128xf32>
    %78 = math.tanh %77 : vector<8x128xf32>
    %79 = arith.mulf %73, %78 : vector<8x128xf32>
    %c0_35 = arith.constant 0 : index
    %c0_36 = arith.constant 0 : index
    %80 = vector.load %arg10[%c0_35, %c0_36] : memref<8x128xf32, #tpu.memory_space<vmem>>, vector<8x128xf32>
    tpu.vector_store %arg10[%c0_35, %c0_36], %77 {strides = array<i32>} : memref<8x128xf32, #tpu.memory_space<vmem>>, vector<8x128xf32>,
    %c0_37 = arith.constant 0 : index
    %c0_38 = arith.constant 0 : index
    %81 = vector.load %arg9[%c0_37, %c0_38] : memref<8x128xf32, #tpu.memory_space<vmem>>, vector<8x128xf32>
    tpu.vector_store %arg9[%c0_37, %c0_38], %79 {strides = array<i32>} : memref<8x128xf32, #tpu.memory_space<vmem>>, vector<8x128xf32>,
    %c2_i32 = arith.constant 2 : i32
    %c8_i32_39 = arith.constant 8 : i32
    %82 = arith.muli %c2_i32, %c8_i32_39 : i32
    %83 = tpu.assume_multiple %82, 8 : i32
    %84 = arith.index_cast %83 : i32 to index
    %c0_40 = arith.constant 0 : index
    %85 = vector.load %arg11[%84, %c0_40] : memref<64x512xf32, #tpu.memory_space<vmem>>, vector<8x512xf32>
    %c0_41 = arith.constant 0 : index
    %c0_42 = arith.constant 0 : index
    %86 = vector.load %arg9[%c0_41, %c0_42] : memref<8x128xf32, #tpu.memory_space<vmem>>, vector<8x128xf32>
    %cst_43 = arith.constant dense<0.000000e+00> : vector<8x512xf32>
    %87 = tpu.matmul %86, %11, %cst_43 {dimension_numbers = #tpu.dot_dimension_numbers<[1], [0], [0], [1], [0, 0, 1, 1], [], []>} : vector<8x128xf32>, vector<128x512xf32>, vector<8x512xf32> -> vector<8x512xf32>
    %88 = arith.addf %85, %87 : vector<8x512xf32>
    %89 = vector.extract_strided_slice %88 {offsets = [0, 0], sizes = [8, 128], strides = [1, 1]} : vector<8x512xf32> to vector<8x128xf32>
    %90 = arith.negf %89 : vector<8x128xf32>
    %91 = math.exp %90 : vector<8x128xf32>
    %cst_44 = arith.constant 1.000000e+00 : f32
    %92 = vector.broadcast %cst_44 : f32 to vector<8x128xf32>
    %93 = arith.addf %92, %91 : vector<8x128xf32>
    %94 = arith.divf %92, %93 : vector<8x128xf32>
    %95 = vector.extract_strided_slice %88 {offsets = [0, 128], sizes = [8, 128], strides = [1, 1]} : vector<8x512xf32> to vector<8x128xf32>
    %96 = arith.negf %95 : vector<8x128xf32>
    %97 = math.exp %96 : vector<8x128xf32>
    %cst_45 = arith.constant 1.000000e+00 : f32
    %98 = vector.broadcast %cst_45 : f32 to vector<8x128xf32>
    %99 = arith.addf %98, %97 : vector<8x128xf32>
    %100 = arith.divf %98, %99 : vector<8x128xf32>
    %101 = vector.extract_strided_slice %88 {offsets = [0, 256], sizes = [8, 128], strides = [1, 1]} : vector<8x512xf32> to vector<8x128xf32>
    %102 = math.tanh %101 : vector<8x128xf32>
    %103 = vector.extract_strided_slice %88 {offsets = [0, 384], sizes = [8, 128], strides = [1, 1]} : vector<8x512xf32> to vector<8x128xf32>
    %104 = arith.negf %103 : vector<8x128xf32>
    %105 = math.exp %104 : vector<8x128xf32>
    %cst_46 = arith.constant 1.000000e+00 : f32
    %106 = vector.broadcast %cst_46 : f32 to vector<8x128xf32>
    %107 = arith.addf %106, %105 : vector<8x128xf32>
    %108 = arith.divf %106, %107 : vector<8x128xf32>
    %c0_47 = arith.constant 0 : index
    %c0_48 = arith.constant 0 : index
    %109 = vector.load %arg10[%c0_47, %c0_48] : memref<8x128xf32, #tpu.memory_space<vmem>>, vector<8x128xf32>
    %110 = arith.mulf %100, %109 : vector<8x128xf32>
    %111 = arith.mulf %94, %102 : vector<8x128xf32>
    %112 = arith.addf %110, %111 : vector<8x128xf32>
    %113 = math.tanh %112 : vector<8x128xf32>
    %114 = arith.mulf %108, %113 : vector<8x128xf32>
    %c0_49 = arith.constant 0 : index
    %c0_50 = arith.constant 0 : index
    %115 = vector.load %arg10[%c0_49, %c0_50] : memref<8x128xf32, #tpu.memory_space<vmem>>, vector<8x128xf32>
    tpu.vector_store %arg10[%c0_49, %c0_50], %112 {strides = array<i32>} : memref<8x128xf32, #tpu.memory_space<vmem>>, vector<8x128xf32>,
    %c0_51 = arith.constant 0 : index
    %c0_52 = arith.constant 0 : index
    %116 = vector.load %arg9[%c0_51, %c0_52] : memref<8x128xf32, #tpu.memory_space<vmem>>, vector<8x128xf32>
    tpu.vector_store %arg9[%c0_51, %c0_52], %114 {strides = array<i32>} : memref<8x128xf32, #tpu.memory_space<vmem>>, vector<8x128xf32>,
    %c3_i32 = arith.constant 3 : i32
    %c8_i32_53 = arith.constant 8 : i32
    %117 = arith.muli %c3_i32, %c8_i32_53 : i32
    %118 = tpu.assume_multiple %117, 8 : i32
    %119 = arith.index_cast %118 : i32 to index
    %c0_54 = arith.constant 0 : index
    %120 = vector.load %arg11[%119, %c0_54] : memref<64x512xf32, #tpu.memory_space<vmem>>, vector<8x512xf32>
    %c0_55 = arith.constant 0 : index
    %c0_56 = arith.constant 0 : index
    %121 = vector.load %arg9[%c0_55, %c0_56] : memref<8x128xf32, #tpu.memory_space<vmem>>, vector<8x128xf32>
    %cst_57 = arith.constant dense<0.000000e+00> : vector<8x512xf32>
    %122 = tpu.matmul %121, %11, %cst_57 {dimension_numbers = #tpu.dot_dimension_numbers<[1], [0], [0], [1], [0, 0, 1, 1], [], []>} : vector<8x128xf32>, vector<128x512xf32>, vector<8x512xf32> -> vector<8x512xf32>
    %123 = arith.addf %120, %122 : vector<8x512xf32>
    %124 = vector.extract_strided_slice %123 {offsets = [0, 0], sizes = [8, 128], strides = [1, 1]} : vector<8x512xf32> to vector<8x128xf32>
    %125 = arith.negf %124 : vector<8x128xf32>
    %126 = math.exp %125 : vector<8x128xf32>
    %cst_58 = arith.constant 1.000000e+00 : f32
    %127 = vector.broadcast %cst_58 : f32 to vector<8x128xf32>
    %128 = arith.addf %127, %126 : vector<8x128xf32>
    %129 = arith.divf %127, %128 : vector<8x128xf32>
    %130 = vector.extract_strided_slice %123 {offsets = [0, 128], sizes = [8, 128], strides = [1, 1]} : vector<8x512xf32> to vector<8x128xf32>
    %131 = arith.negf %130 : vector<8x128xf32>
    %132 = math.exp %131 : vector<8x128xf32>
    %cst_59 = arith.constant 1.000000e+00 : f32
    %133 = vector.broadcast %cst_59 : f32 to vector<8x128xf32>
    %134 = arith.addf %133, %132 : vector<8x128xf32>
    %135 = arith.divf %133, %134 : vector<8x128xf32>
    %136 = vector.extract_strided_slice %123 {offsets = [0, 256], sizes = [8, 128], strides = [1, 1]} : vector<8x512xf32> to vector<8x128xf32>
    %137 = math.tanh %136 : vector<8x128xf32>
    %138 = vector.extract_strided_slice %123 {offsets = [0, 384], sizes = [8, 128], strides = [1, 1]} : vector<8x512xf32> to vector<8x128xf32>
    %139 = arith.negf %138 : vector<8x128xf32>
    %140 = math.exp %139 : vector<8x128xf32>
    %cst_60 = arith.constant 1.000000e+00 : f32
    %141 = vector.broadcast %cst_60 : f32 to vector<8x128xf32>
    %142 = arith.addf %141, %140 : vector<8x128xf32>
    %143 = arith.divf %141, %142 : vector<8x128xf32>
    %c0_61 = arith.constant 0 : index
    %c0_62 = arith.constant 0 : index
    %144 = vector.load %arg10[%c0_61, %c0_62] : memref<8x128xf32, #tpu.memory_space<vmem>>, vector<8x128xf32>
    %145 = arith.mulf %135, %144 : vector<8x128xf32>
    %146 = arith.mulf %129, %137 : vector<8x128xf32>
    %147 = arith.addf %145, %146 : vector<8x128xf32>
    %148 = math.tanh %147 : vector<8x128xf32>
    %149 = arith.mulf %143, %148 : vector<8x128xf32>
    %c0_63 = arith.constant 0 : index
    %c0_64 = arith.constant 0 : index
    %150 = vector.load %arg10[%c0_63, %c0_64] : memref<8x128xf32, #tpu.memory_space<vmem>>, vector<8x128xf32>
    tpu.vector_store %arg10[%c0_63, %c0_64], %147 {strides = array<i32>} : memref<8x128xf32, #tpu.memory_space<vmem>>, vector<8x128xf32>,
    %c0_65 = arith.constant 0 : index
    %c0_66 = arith.constant 0 : index
    %151 = vector.load %arg9[%c0_65, %c0_66] : memref<8x128xf32, #tpu.memory_space<vmem>>, vector<8x128xf32>
    tpu.vector_store %arg9[%c0_65, %c0_66], %149 {strides = array<i32>} : memref<8x128xf32, #tpu.memory_space<vmem>>, vector<8x128xf32>,
    %c4_i32 = arith.constant 4 : i32
    %c8_i32_67 = arith.constant 8 : i32
    %152 = arith.muli %c4_i32, %c8_i32_67 : i32
    %153 = tpu.assume_multiple %152, 8 : i32
    %154 = arith.index_cast %153 : i32 to index
    %c0_68 = arith.constant 0 : index
    %155 = vector.load %arg11[%154, %c0_68] : memref<64x512xf32, #tpu.memory_space<vmem>>, vector<8x512xf32>
    %c0_69 = arith.constant 0 : index
    %c0_70 = arith.constant 0 : index
    %156 = vector.load %arg9[%c0_69, %c0_70] : memref<8x128xf32, #tpu.memory_space<vmem>>, vector<8x128xf32>
    %cst_71 = arith.constant dense<0.000000e+00> : vector<8x512xf32>
    %157 = tpu.matmul %156, %11, %cst_71 {dimension_numbers = #tpu.dot_dimension_numbers<[1], [0], [0], [1], [0, 0, 1, 1], [], []>} : vector<8x128xf32>, vector<128x512xf32>, vector<8x512xf32> -> vector<8x512xf32>
    %158 = arith.addf %155, %157 : vector<8x512xf32>
    %159 = vector.extract_strided_slice %158 {offsets = [0, 0], sizes = [8, 128], strides = [1, 1]} : vector<8x512xf32> to vector<8x128xf32>
    %160 = arith.negf %159 : vector<8x128xf32>
    %161 = math.exp %160 : vector<8x128xf32>
    %cst_72 = arith.constant 1.000000e+00 : f32
    %162 = vector.broadcast %cst_72 : f32 to vector<8x128xf32>
    %163 = arith.addf %162, %161 : vector<8x128xf32>
    %164 = arith.divf %162, %163 : vector<8x128xf32>
    %165 = vector.extract_strided_slice %158 {offsets = [0, 128], sizes = [8, 128], strides = [1, 1]} : vector<8x512xf32> to vector<8x128xf32>
    %166 = arith.negf %165 : vector<8x128xf32>
    %167 = math.exp %166 : vector<8x128xf32>
    %cst_73 = arith.constant 1.000000e+00 : f32
    %168 = vector.broadcast %cst_73 : f32 to vector<8x128xf32>
    %169 = arith.addf %168, %167 : vector<8x128xf32>
    %170 = arith.divf %168, %169 : vector<8x128xf32>
    %171 = vector.extract_strided_slice %158 {offsets = [0, 256], sizes = [8, 128], strides = [1, 1]} : vector<8x512xf32> to vector<8x128xf32>
    %172 = math.tanh %171 : vector<8x128xf32>
    %173 = vector.extract_strided_slice %158 {offsets = [0, 384], sizes = [8, 128], strides = [1, 1]} : vector<8x512xf32> to vector<8x128xf32>
    %174 = arith.negf %173 : vector<8x128xf32>
    %175 = math.exp %174 : vector<8x128xf32>
    %cst_74 = arith.constant 1.000000e+00 : f32
    %176 = vector.broadcast %cst_74 : f32 to vector<8x128xf32>
    %177 = arith.addf %176, %175 : vector<8x128xf32>
    %178 = arith.divf %176, %177 : vector<8x128xf32>
    %c0_75 = arith.constant 0 : index
    %c0_76 = arith.constant 0 : index
    %179 = vector.load %arg10[%c0_75, %c0_76] : memref<8x128xf32, #tpu.memory_space<vmem>>, vector<8x128xf32>
    %180 = arith.mulf %170, %179 : vector<8x128xf32>
    %181 = arith.mulf %164, %172 : vector<8x128xf32>
    %182 = arith.addf %180, %181 : vector<8x128xf32>
    %183 = math.tanh %182 : vector<8x128xf32>
    %184 = arith.mulf %178, %183 : vector<8x128xf32>
    %c0_77 = arith.constant 0 : index
    %c0_78 = arith.constant 0 : index
    %185 = vector.load %arg10[%c0_77, %c0_78] : memref<8x128xf32, #tpu.memory_space<vmem>>, vector<8x128xf32>
    tpu.vector_store %arg10[%c0_77, %c0_78], %182 {strides = array<i32>} : memref<8x128xf32, #tpu.memory_space<vmem>>, vector<8x128xf32>,
    %c0_79 = arith.constant 0 : index
    %c0_80 = arith.constant 0 : index
    %186 = vector.load %arg9[%c0_79, %c0_80] : memref<8x128xf32, #tpu.memory_space<vmem>>, vector<8x128xf32>
    tpu.vector_store %arg9[%c0_79, %c0_80], %184 {strides = array<i32>} : memref<8x128xf32, #tpu.memory_space<vmem>>, vector<8x128xf32>,
    %c5_i32 = arith.constant 5 : i32
    %c8_i32_81 = arith.constant 8 : i32
    %187 = arith.muli %c5_i32, %c8_i32_81 : i32
    %188 = tpu.assume_multiple %187, 8 : i32
    %189 = arith.index_cast %188 : i32 to index
    %c0_82 = arith.constant 0 : index
    %190 = vector.load %arg11[%189, %c0_82] : memref<64x512xf32, #tpu.memory_space<vmem>>, vector<8x512xf32>
    %c0_83 = arith.constant 0 : index
    %c0_84 = arith.constant 0 : index
    %191 = vector.load %arg9[%c0_83, %c0_84] : memref<8x128xf32, #tpu.memory_space<vmem>>, vector<8x128xf32>
    %cst_85 = arith.constant dense<0.000000e+00> : vector<8x512xf32>
    %192 = tpu.matmul %191, %11, %cst_85 {dimension_numbers = #tpu.dot_dimension_numbers<[1], [0], [0], [1], [0, 0, 1, 1], [], []>} : vector<8x128xf32>, vector<128x512xf32>, vector<8x512xf32> -> vector<8x512xf32>
    %193 = arith.addf %190, %192 : vector<8x512xf32>
    %194 = vector.extract_strided_slice %193 {offsets = [0, 0], sizes = [8, 128], strides = [1, 1]} : vector<8x512xf32> to vector<8x128xf32>
    %195 = arith.negf %194 : vector<8x128xf32>
    %196 = math.exp %195 : vector<8x128xf32>
    %cst_86 = arith.constant 1.000000e+00 : f32
    %197 = vector.broadcast %cst_86 : f32 to vector<8x128xf32>
    %198 = arith.addf %197, %196 : vector<8x128xf32>
    %199 = arith.divf %197, %198 : vector<8x128xf32>
    %200 = vector.extract_strided_slice %193 {offsets = [0, 128], sizes = [8, 128], strides = [1, 1]} : vector<8x512xf32> to vector<8x128xf32>
    %201 = arith.negf %200 : vector<8x128xf32>
    %202 = math.exp %201 : vector<8x128xf32>
    %cst_87 = arith.constant 1.000000e+00 : f32
    %203 = vector.broadcast %cst_87 : f32 to vector<8x128xf32>
    %204 = arith.addf %203, %202 : vector<8x128xf32>
    %205 = arith.divf %203, %204 : vector<8x128xf32>
    %206 = vector.extract_strided_slice %193 {offsets = [0, 256], sizes = [8, 128], strides = [1, 1]} : vector<8x512xf32> to vector<8x128xf32>
    %207 = math.tanh %206 : vector<8x128xf32>
    %208 = vector.extract_strided_slice %193 {offsets = [0, 384], sizes = [8, 128], strides = [1, 1]} : vector<8x512xf32> to vector<8x128xf32>
    %209 = arith.negf %208 : vector<8x128xf32>
    %210 = math.exp %209 : vector<8x128xf32>
    %cst_88 = arith.constant 1.000000e+00 : f32
    %211 = vector.broadcast %cst_88 : f32 to vector<8x128xf32>
    %212 = arith.addf %211, %210 : vector<8x128xf32>
    %213 = arith.divf %211, %212 : vector<8x128xf32>
    %c0_89 = arith.constant 0 : index
    %c0_90 = arith.constant 0 : index
    %214 = vector.load %arg10[%c0_89, %c0_90] : memref<8x128xf32, #tpu.memory_space<vmem>>, vector<8x128xf32>
    %215 = arith.mulf %205, %214 : vector<8x128xf32>
    %216 = arith.mulf %199, %207 : vector<8x128xf32>
    %217 = arith.addf %215, %216 : vector<8x128xf32>
    %218 = math.tanh %217 : vector<8x128xf32>
    %219 = arith.mulf %213, %218 : vector<8x128xf32>
    %c0_91 = arith.constant 0 : index
    %c0_92 = arith.constant 0 : index
    %220 = vector.load %arg10[%c0_91, %c0_92] : memref<8x128xf32, #tpu.memory_space<vmem>>, vector<8x128xf32>
    tpu.vector_store %arg10[%c0_91, %c0_92], %217 {strides = array<i32>} : memref<8x128xf32, #tpu.memory_space<vmem>>, vector<8x128xf32>,
    %c0_93 = arith.constant 0 : index
    %c0_94 = arith.constant 0 : index
    %221 = vector.load %arg9[%c0_93, %c0_94] : memref<8x128xf32, #tpu.memory_space<vmem>>, vector<8x128xf32>
    tpu.vector_store %arg9[%c0_93, %c0_94], %219 {strides = array<i32>} : memref<8x128xf32, #tpu.memory_space<vmem>>, vector<8x128xf32>,
    %c6_i32 = arith.constant 6 : i32
    %c8_i32_95 = arith.constant 8 : i32
    %222 = arith.muli %c6_i32, %c8_i32_95 : i32
    %223 = tpu.assume_multiple %222, 8 : i32
    %224 = arith.index_cast %223 : i32 to index
    %c0_96 = arith.constant 0 : index
    %225 = vector.load %arg11[%224, %c0_96] : memref<64x512xf32, #tpu.memory_space<vmem>>, vector<8x512xf32>
    %c0_97 = arith.constant 0 : index
    %c0_98 = arith.constant 0 : index
    %226 = vector.load %arg9[%c0_97, %c0_98] : memref<8x128xf32, #tpu.memory_space<vmem>>, vector<8x128xf32>
    %cst_99 = arith.constant dense<0.000000e+00> : vector<8x512xf32>
    %227 = tpu.matmul %226, %11, %cst_99 {dimension_numbers = #tpu.dot_dimension_numbers<[1], [0], [0], [1], [0, 0, 1, 1], [], []>} : vector<8x128xf32>, vector<128x512xf32>, vector<8x512xf32> -> vector<8x512xf32>
    %228 = arith.addf %225, %227 : vector<8x512xf32>
    %229 = vector.extract_strided_slice %228 {offsets = [0, 0], sizes = [8, 128], strides = [1, 1]} : vector<8x512xf32> to vector<8x128xf32>
    %230 = arith.negf %229 : vector<8x128xf32>
    %231 = math.exp %230 : vector<8x128xf32>
    %cst_100 = arith.constant 1.000000e+00 : f32
    %232 = vector.broadcast %cst_100 : f32 to vector<8x128xf32>
    %233 = arith.addf %232, %231 : vector<8x128xf32>
    %234 = arith.divf %232, %233 : vector<8x128xf32>
    %235 = vector.extract_strided_slice %228 {offsets = [0, 128], sizes = [8, 128], strides = [1, 1]} : vector<8x512xf32> to vector<8x128xf32>
    %236 = arith.negf %235 : vector<8x128xf32>
    %237 = math.exp %236 : vector<8x128xf32>
    %cst_101 = arith.constant 1.000000e+00 : f32
    %238 = vector.broadcast %cst_101 : f32 to vector<8x128xf32>
    %239 = arith.addf %238, %237 : vector<8x128xf32>
    %240 = arith.divf %238, %239 : vector<8x128xf32>
    %241 = vector.extract_strided_slice %228 {offsets = [0, 256], sizes = [8, 128], strides = [1, 1]} : vector<8x512xf32> to vector<8x128xf32>
    %242 = math.tanh %241 : vector<8x128xf32>
    %243 = vector.extract_strided_slice %228 {offsets = [0, 384], sizes = [8, 128], strides = [1, 1]} : vector<8x512xf32> to vector<8x128xf32>
    %244 = arith.negf %243 : vector<8x128xf32>
    %245 = math.exp %244 : vector<8x128xf32>
    %cst_102 = arith.constant 1.000000e+00 : f32
    %246 = vector.broadcast %cst_102 : f32 to vector<8x128xf32>
    %247 = arith.addf %246, %245 : vector<8x128xf32>
    %248 = arith.divf %246, %247 : vector<8x128xf32>
    %c0_103 = arith.constant 0 : index
    %c0_104 = arith.constant 0 : index
    %249 = vector.load %arg10[%c0_103, %c0_104] : memref<8x128xf32, #tpu.memory_space<vmem>>, vector<8x128xf32>
    %250 = arith.mulf %240, %249 : vector<8x128xf32>
    %251 = arith.mulf %234, %242 : vector<8x128xf32>
    %252 = arith.addf %250, %251 : vector<8x128xf32>
    %253 = math.tanh %252 : vector<8x128xf32>
    %254 = arith.mulf %248, %253 : vector<8x128xf32>
    %c0_105 = arith.constant 0 : index
    %c0_106 = arith.constant 0 : index
    %255 = vector.load %arg10[%c0_105, %c0_106] : memref<8x128xf32, #tpu.memory_space<vmem>>, vector<8x128xf32>
    tpu.vector_store %arg10[%c0_105, %c0_106], %252 {strides = array<i32>} : memref<8x128xf32, #tpu.memory_space<vmem>>, vector<8x128xf32>,
    %c0_107 = arith.constant 0 : index
    %c0_108 = arith.constant 0 : index
    %256 = vector.load %arg9[%c0_107, %c0_108] : memref<8x128xf32, #tpu.memory_space<vmem>>, vector<8x128xf32>
    tpu.vector_store %arg9[%c0_107, %c0_108], %254 {strides = array<i32>} : memref<8x128xf32, #tpu.memory_space<vmem>>, vector<8x128xf32>,
    %c7_i32 = arith.constant 7 : i32
    %c8_i32_109 = arith.constant 8 : i32
    %257 = arith.muli %c7_i32, %c8_i32_109 : i32
    %258 = tpu.assume_multiple %257, 8 : i32
    %259 = arith.index_cast %258 : i32 to index
    %c0_110 = arith.constant 0 : index
    %260 = vector.load %arg11[%259, %c0_110] : memref<64x512xf32, #tpu.memory_space<vmem>>, vector<8x512xf32>
    %c0_111 = arith.constant 0 : index
    %c0_112 = arith.constant 0 : index
    %261 = vector.load %arg9[%c0_111, %c0_112] : memref<8x128xf32, #tpu.memory_space<vmem>>, vector<8x128xf32>
    %cst_113 = arith.constant dense<0.000000e+00> : vector<8x512xf32>
    %262 = tpu.matmul %261, %11, %cst_113 {dimension_numbers = #tpu.dot_dimension_numbers<[1], [0], [0], [1], [0, 0, 1, 1], [], []>} : vector<8x128xf32>, vector<128x512xf32>, vector<8x512xf32> -> vector<8x512xf32>
    %263 = arith.addf %260, %262 : vector<8x512xf32>
    %264 = vector.extract_strided_slice %263 {offsets = [0, 0], sizes = [8, 128], strides = [1, 1]} : vector<8x512xf32> to vector<8x128xf32>
    %265 = arith.negf %264 : vector<8x128xf32>
    %266 = math.exp %265 : vector<8x128xf32>
    %cst_114 = arith.constant 1.000000e+00 : f32
    %267 = vector.broadcast %cst_114 : f32 to vector<8x128xf32>
    %268 = arith.addf %267, %266 : vector<8x128xf32>
    %269 = arith.divf %267, %268 : vector<8x128xf32>
    %270 = vector.extract_strided_slice %263 {offsets = [0, 128], sizes = [8, 128], strides = [1, 1]} : vector<8x512xf32> to vector<8x128xf32>
    %271 = arith.negf %270 : vector<8x128xf32>
    %272 = math.exp %271 : vector<8x128xf32>
    %cst_115 = arith.constant 1.000000e+00 : f32
    %273 = vector.broadcast %cst_115 : f32 to vector<8x128xf32>
    %274 = arith.addf %273, %272 : vector<8x128xf32>
    %275 = arith.divf %273, %274 : vector<8x128xf32>
    %276 = vector.extract_strided_slice %263 {offsets = [0, 256], sizes = [8, 128], strides = [1, 1]} : vector<8x512xf32> to vector<8x128xf32>
    %277 = math.tanh %276 : vector<8x128xf32>
    %278 = vector.extract_strided_slice %263 {offsets = [0, 384], sizes = [8, 128], strides = [1, 1]} : vector<8x512xf32> to vector<8x128xf32>
    %279 = arith.negf %278 : vector<8x128xf32>
    %280 = math.exp %279 : vector<8x128xf32>
    %cst_116 = arith.constant 1.000000e+00 : f32
    %281 = vector.broadcast %cst_116 : f32 to vector<8x128xf32>
    %282 = arith.addf %281, %280 : vector<8x128xf32>
    %283 = arith.divf %281, %282 : vector<8x128xf32>
    %c0_117 = arith.constant 0 : index
    %c0_118 = arith.constant 0 : index
    %284 = vector.load %arg10[%c0_117, %c0_118] : memref<8x128xf32, #tpu.memory_space<vmem>>, vector<8x128xf32>
    %285 = arith.mulf %275, %284 : vector<8x128xf32>
    %286 = arith.mulf %269, %277 : vector<8x128xf32>
    %287 = arith.addf %285, %286 : vector<8x128xf32>
    %288 = math.tanh %287 : vector<8x128xf32>
    %289 = arith.mulf %283, %288 : vector<8x128xf32>
    %c0_119 = arith.constant 0 : index
    %c0_120 = arith.constant 0 : index
    %290 = vector.load %arg10[%c0_119, %c0_120] : memref<8x128xf32, #tpu.memory_space<vmem>>, vector<8x128xf32>
    tpu.vector_store %arg10[%c0_119, %c0_120], %287 {strides = array<i32>} : memref<8x128xf32, #tpu.memory_space<vmem>>, vector<8x128xf32>,
    %c0_121 = arith.constant 0 : index
    %c0_122 = arith.constant 0 : index
    %291 = vector.load %arg9[%c0_121, %c0_122] : memref<8x128xf32, #tpu.memory_space<vmem>>, vector<8x128xf32>
    tpu.vector_store %arg9[%c0_121, %c0_122], %289 {strides = array<i32>} : memref<8x128xf32, #tpu.memory_space<vmem>>, vector<8x128xf32>,
    %c8_i32_123 = arith.constant 8 : i32
    %c0_i32_124 = arith.constant 0 : i32
    %292 = arith.cmpi eq, %arg1, %c0_i32_124 : i32
    %293 = arith.extui %292 : i1 to i32
    %c0_i32_125 = arith.constant 0 : i32
    %294 = arith.cmpi ne, %293, %c0_i32_125 : i32
    scf.if %294 {
      %c0_126 = arith.constant 0 : index
      %c0_127 = arith.constant 0 : index
      %295 = vector.load %arg9[%c0_126, %c0_127] : memref<8x128xf32, #tpu.memory_space<vmem>>, vector<8x128xf32>
      %c0_128 = arith.constant 0 : index
      %c0_129 = arith.constant 0 : index
      %296 = vector.load %arg6[%c0_128, %c0_129] : memref<128x128xf32, #tpu.memory_space<vmem>>, vector<128x128xf32>
      %cst_130 = arith.constant dense<0.000000e+00> : vector<8x128xf32>
      %297 = tpu.matmul %295, %296, %cst_130 {dimension_numbers = #tpu.dot_dimension_numbers<[1], [0], [0], [1], [0, 0, 1, 1], [], []>} : vector<8x128xf32>, vector<128x128xf32>, vector<8x128xf32> -> vector<8x128xf32>
      %c0_131 = arith.constant 0 : index
      %c0_132 = arith.constant 0 : index
      %298 = vector.load %arg7[%c0_131, %c0_132] : memref<1x128xf32, #tpu.memory_space<vmem>>, vector<1x128xf32>
      %299 = vector.broadcast %298 : vector<1x128xf32> to vector<8x128xf32>
      %300 = arith.addf %297, %299 : vector<8x128xf32>
      %c0_133 = arith.constant 0 : index
      %c0_134 = arith.constant 0 : index
      %301 = vector.load %arg8[%c0_133, %c0_134] : memref<8x128xf32, #tpu.memory_space<vmem>>, vector<8x128xf32>
      tpu.vector_store %arg8[%c0_133, %c0_134], %300 {strides = array<i32>} : memref<8x128xf32, #tpu.memory_space<vmem>>, vector<8x128xf32>,
    } else {
    }
    return
  }
  func.func @transform_0(%arg0: i32, %arg1: i32) -> (i32, i32, i32) {
    %c0_i32 = arith.constant 0 : i32
    %c0_i32_0 = arith.constant 0 : i32
    return %arg1, %arg0, %c0_i32 : i32, i32, i32
  }
  func.func @transform_1(%arg0: i32, %arg1: i32) -> (i32, i32) {
    %c0_i32 = arith.constant 0 : i32
    %c0_i32_0 = arith.constant 0 : i32
    %c0_i32_1 = arith.constant 0 : i32
    return %c0_i32, %c0_i32_0 : i32, i32
  }
  func.func @transform_2(%arg0: i32, %arg1: i32) -> (i32, i32) {
    %c0_i32 = arith.constant 0 : i32
    %c0_i32_0 = arith.constant 0 : i32
    %c0_i32_1 = arith.constant 0 : i32
    return %c0_i32, %c0_i32_0 : i32, i32
  }
  func.func @transform_3(%arg0: i32, %arg1: i32) -> (i32, i32) {
    %c0_i32 = arith.constant 0 : i32
    %c0_i32_0 = arith.constant 0 : i32
    %c0_i32_1 = arith.constant 0 : i32
    return %c0_i32, %c0_i32_0 : i32, i32
  }
  func.func @transform_4(%arg0: i32, %arg1: i32) -> (i32, i32) {
    %c0_i32 = arith.constant 0 : i32
    %c0_i32_0 = arith.constant 0 : i32
    %c0_i32_1 = arith.constant 0 : i32
    return %c0_i32, %c0_i32_0 : i32, i32
  }
  func.func @transform_5(%arg0: i32, %arg1: i32) -> (i32, i32) {
    %c0_i32 = arith.constant 0 : i32
    %c0_i32_0 = arith.constant 0 : i32
    %c0_i32_1 = arith.constant 0 : i32
    return %c0_i32, %c0_i32_0 : i32, i32
  }
  func.func @transform_6(%arg0: i32, %arg1: i32) -> (i32, i32) {
    %c0_i32 = arith.constant 0 : i32
    %c0_i32_0 = arith.constant 0 : i32
    return %arg0, %c0_i32 : i32, i32
  }
}

</mosaic_0001>

<llo_original>
// kernel: tpu_custom_call.1
$region0: #{tpu_custom_call.1}
  #allocation0 [shape = 'u32[]', space=smem, size = 0x4, offset = 0x4, fixed_abs, tag = 'smem constant byte address 0x4 - core index']
  #allocation1 [shape = 'u32[144,128]{1,0:T(1,128)}', space=vmem, size = 0x12000, scoped, tag = 'internal scratch']
  #allocation2 [shape = 'f32[8,128]{1,0:T(8,128)}', space=vmem, size = 0x1000, scoped, tag = 'scratch operand']
  #allocation3 [shape = 'f32[8,128]{1,0:T(8,128)}', space=vmem, size = 0x1000, scoped, tag = 'scratch operand']
  #allocation4 [shape = 'f32[64,512]{1,0:T(8,128)}', space=vmem, size = 0x20000, scoped, tag = 'scratch operand']
  %s0 = inlined_call_operand.hbm [shape: f32[8,8,128], index: 0, kind: input, shape index: {}]
  %s1 = inlined_call_operand.hbm [shape: f32[128,512], index: 1, kind: input, shape index: {}]
  %s2 = inlined_call_operand.hbm [shape: f32[128,512], index: 2, kind: input, shape index: {}]
  %s3 = inlined_call_operand.vmem [shape: f32[1,512], index: 3, kind: input, shape index: {}]
  %s4 = inlined_call_operand.hbm [shape: f32[128,128], index: 4, kind: input, shape index: {}]
  %s5 = inlined_call_operand.vmem [shape: f32[1,128], index: 5, kind: input, shape index: {}]
  %s6 = inlined_call_operand.hbm [shape: f32[8,128], index: 6, kind: output, shape index: {}]
  %s7 = sld [smem:[#allocation0]]
  $region58: #{tpu_custom_call.1} parent=0
    _
  %s9 = ssub.s32 1, %s7
  %s10 = scalar_select 0, %s9, %s7
  $region1: #{tpu_custom_call.1} parent=0
    #allocation5 [shape = 'u8[32768]{0}', space=vmem, size = 0x8000, scoped, tag = 'input window, operand 0, single buffered']
    #allocation6 [shape = 's32[1]{0}', space=sflag, size = 0x4, scoped, tag = 'scoped memory for tpu_custom_call.1']
    #allocation7 [shape = 's32[1]{0}', space=sflag, size = 0x4, scoped, tag = 'scoped memory for tpu_custom_call.1']
    #allocation8 [shape = 'u8[262144]{0}', space=vmem, size = 0x40000, scoped, tag = 'input window, operand 1, single buffered']
    #allocation9 [shape = 's32[1]{0}', space=sflag, size = 0x4, scoped, tag = 'scoped memory for tpu_custom_call.1']
    #allocation10 [shape = 'u8[262144]{0}', space=vmem, size = 0x40000, scoped, tag = 'input window, operand 2, single buffered']
    #allocation11 [shape = 'u8[65536]{0}', space=vmem, size = 0x10000, scoped, tag = 'input window, operand 4, single buffered']
    #allocation12 [shape = 's32[1]{0}', space=sflag, size = 0x4, scoped, tag = 'scoped memory for tpu_custom_call.1']
    #allocation13 [shape = 'u8[4096]{0}', space=vmem, size = 0x1000, scoped, tag = 'output window, operand 0, single buffered']
    %11 = vsyncpa [#allocation6], 0
    %12 = vsyncpa [#allocation9], 0
    %13 = vsyncpa [#allocation12], 0
    %14 = vsyncpa [#allocation7], 0
    // Predicated region
    $region2: #{tpu_custom_call.1} parent=1 // pred_check
      _
    $region3: #{tpu_custom_call.1} parent=1 // pred_check_branch
      %16 = sbr.rel (0) target = $region5
    $region4: #{tpu_custom_call.1} parent=1 // pred_region
      %s18 = ssub.s32 1024, 1024
      %19 = vsyncadd [#allocation6], %s18
      %s20 = sshll.u32 [#allocation5], 4
      %s21 = int_to_ptr.vmem [resolvable:$true] %s20
      %26 = dma.hbm_to_vmem [thread:$0]  %s0, 1024, %s21, [#allocation6], 128, 128, 8
    $region5: #{tpu_custom_call.1} parent=1 // pred_fallthru
      _
    // Predicated region
    $region6: #{tpu_custom_call.1} parent=1 // pred_check
      _
    $region7: #{tpu_custom_call.1} parent=1 // pred_check_branch
      %28 = sbr.rel (0) target = $region9
    $region8: #{tpu_custom_call.1} parent=1 // pred_region
      %s30 = ssub.s32 8192, 8192
      %31 = vsyncadd [#allocation9], %s30
      %s32 = sshll.u32 [#allocation8], 4
      %s33 = int_to_ptr.vmem [resolvable:$true] %s32
      %38 = dma.hbm_to_vmem [thread:$0]  %s1, 8192, %s33, [#allocation9], 512, 512, 32
    $region9: #{tpu_custom_call.1} parent=1 // pred_fallthru
      _
    // Predicated region
    $region10: #{tpu_custom_call.1} parent=1 // pred_check
      _
    $region11: #{tpu_custom_call.1} parent=1 // pred_check_branch
      %40 = sbr.rel (0) target = $region13
    $region12: #{tpu_custom_call.1} parent=1 // pred_region
      %s42 = ssub.s32 8192, 8192
      %43 = vsyncadd [#allocation9], %s42
      %s44 = sshll.u32 [#allocation10], 4
      %s45 = int_to_ptr.vmem [resolvable:$true] %s44
      %50 = dma.hbm_to_vmem [thread:$0]  %s2, 8192, %s45, [#allocation9], 512, 512, 32
    $region13: #{tpu_custom_call.1} parent=1 // pred_fallthru
      _
    // Predicated region
    $region14: #{tpu_custom_call.1} parent=1 // pred_check
      _
    $region15: #{tpu_custom_call.1} parent=1 // pred_check_branch
      %52 = sbr.rel (0) target = $region17
    $region16: #{tpu_custom_call.1} parent=1 // pred_region
      _
    $region17: #{tpu_custom_call.1} parent=1 // pred_fallthru
      _
    // Predicated region
    $region18: #{tpu_custom_call.1} parent=1 // pred_check
      _
    $region19: #{tpu_custom_call.1} parent=1 // pred_check_branch
      %54 = sbr.rel (0) target = $region21
    $region20: #{tpu_custom_call.1} parent=1 // pred_region
      %s56 = ssub.s32 2048, 2048
      %57 = vsyncadd [#allocation12], %s56
      %s58 = sshll.u32 [#allocation11], 4
      %s59 = int_to_ptr.vmem [resolvable:$true] %s58
      %64 = dma.hbm_to_vmem [thread:$0]  %s4, 2048, %s59, [#allocation12], 128, 128, 8
    $region21: #{tpu_custom_call.1} parent=1 // pred_fallthru
      _
    // Predicated region
    $region22: #{tpu_custom_call.1} parent=1 // pred_check
      _
    $region23: #{tpu_custom_call.1} parent=1 // pred_check_branch
      %66 = sbr.rel (0) target = $region25
    $region24: #{tpu_custom_call.1} parent=1 // pred_region
      _
    $region25: #{tpu_custom_call.1} parent=1 // pred_fallthru
      _
    // Predicated region
    $region26: #{tpu_custom_call.1} parent=1 // pred_check
      _
    $region27: #{tpu_custom_call.1} parent=1 // pred_check_branch
      %68 = sbr.rel (0) target = $region29
    $region28: #{tpu_custom_call.1} parent=1 // pred_region
      %69 = dma.done [#allocation6], 1024
    $region29: #{tpu_custom_call.1} parent=1 // pred_fallthru
      _
    // Predicated region
    $region30: #{tpu_custom_call.1} parent=1 // pred_check
      _
    $region31: #{tpu_custom_call.1} parent=1 // pred_check_branch
      %71 = sbr.rel (0) target = $region33
    $region32: #{tpu_custom_call.1} parent=1 // pred_region
      %72 = dma.done [#allocation9], 8192
    $region33: #{tpu_custom_call.1} parent=1 // pred_fallthru
      _
    // Predicated region
    $region34: #{tpu_custom_call.1} parent=1 // pred_check
      _
    $region35: #{tpu_custom_call.1} parent=1 // pred_check_branch
      %74 = sbr.rel (0) target = $region37
    $region36: #{tpu_custom_call.1} parent=1 // pred_region
      %75 = dma.done [#allocation9], 8192
    $region37: #{tpu_custom_call.1} parent=1 // pred_fallthru
      _
    // Predicated region
    $region38: #{tpu_custom_call.1} parent=1 // pred_check
      _
    $region39: #{tpu_custom_call.1} parent=1 // pred_check_branch
      %77 = sbr.rel (0) target = $region41
    $region40: #{tpu_custom_call.1} parent=1 // pred_region
      %78 = dma.done [#allocation12], 2048
    $region41: #{tpu_custom_call.1} parent=1 // pred_fallthru
      _
    %p79 = scmp.eq.s32.totalorder 0, 0
    // Predicated region
    $region42: #{tpu_custom_call.1} parent=1 // pred_check
      %p80 = pneg %p79
    $region43: #{tpu_custom_call.1} parent=1 // pred_check_branch
      %82 = sbr.rel (%p80) target = $region45
    $region44: #{tpu_custom_call.1} parent=1 // pred_region
      %83 = vst [vmem:[#allocation2] sm:$0xff] 0.0
      %84 = vst [vmem:[#allocation3] sm:$0xff] 0.0
    $region45: #{tpu_custom_call.1} parent=1 // pred_fallthru
      _
    %v85 = vld [vmem:[#allocation5] sm:$0xff]
    %v86 = vld [vmem:[#allocation5 + $0x8] sm:$0xff]
    %v87 = vld [vmem:[#allocation5 + $0x10] sm:$0xff]
    %v88 = vld [vmem:[#allocation5 + $0x18] sm:$0xff]
    %v89 = vld [vmem:[#allocation5 + $0x20] sm:$0xff]
    %v90 = vld [vmem:[#allocation5 + $0x28] sm:$0xff]
    %v91 = vld [vmem:[#allocation5 + $0x30] sm:$0xff]
    %v92 = vld [vmem:[#allocation5 + $0x38] sm:$0xff]
    %v93 = vld [vmem:[#allocation8] sm:$0xff]
    %v94 = vld [vmem:[#allocation8 + $0x8] sm:$0xff]
    %v95 = vld [vmem:[#allocation8 + $0x10] sm:$0xff]
    %v96 = vld [vmem:[#allocation8 + $0x18] sm:$0xff]
    %v97 = vld [vmem:[#allocation8 + $0x20] sm:$0xff]
    %v98 = vld [vmem:[#allocation8 + $0x28] sm:$0xff]
    %v99 = vld [vmem:[#allocation8 + $0x30] sm:$0xff]
    %v100 = vld [vmem:[#allocation8 + $0x38] sm:$0xff]
    %v101 = vld [vmem:[#allocation8 + $0x40] sm:$0xff]
    %v102 = vld [vmem:[#allocation8 + $0x48] sm:$0xff]
    %v103 = vld [vmem:[#allocation8 + $0x50] sm:$0xff]
    %v104 = vld [vmem:[#allocation8 + $0x58] sm:$0xff]
    %v105 = vld [vmem:[#allocation8 + $0x60] sm:$0xff]
    %v106 = vld [vmem:[#allocation8 + $0x68] sm:$0xff]
    %v107 = vld [vmem:[#allocation8 + $0x70] sm:$0xff]
    %v108 = vld [vmem:[#allocation8 + $0x78] sm:$0xff]
    %v109 = vld [vmem:[#allocation8 + $0x80] sm:$0xff]
    %v110 = vld [vmem:[#allocation8 + $0x88] sm:$0xff]
    %v111 = vld [vmem:[#allocation8 + $0x90] sm:$0xff]
    %v112 = vld [vmem:[#allocation8 + $0x98] sm:$0xff]
    %v113 = vld [vmem:[#allocation8 + $0xa0] sm:$0xff]
    %v114 = vld [vmem:[#allocation8 + $0xa8] sm:$0xff]
    %v115 = vld [vmem:[#allocation8 + $0xb0] sm:$0xff]
    %v116 = vld [vmem:[#allocation8 + $0xb8] sm:$0xff]
    %v117 = vld [vmem:[#allocation8 + $0xc0] sm:$0xff]
    %v118 = vld [vmem:[#allocation8 + $0xc8] sm:$0xff]
    %v119 = vld [vmem:[#allocation8 + $0xd0] sm:$0xff]
    %v120 = vld [vmem:[#allocation8 + $0xd8] sm:$0xff]
    %v121 = vld [vmem:[#allocation8 + $0xe0] sm:$0xff]
    %v122 = vld [vmem:[#allocation8 + $0xe8] sm:$0xff]
    %v123 = vld [vmem:[#allocation8 + $0xf0] sm:$0xff]
    %v124 = vld [vmem:[#allocation8 + $0xf8] sm:$0xff]
    %v125 = vld [vmem:[#allocation8 + $0x100] sm:$0xff]
    %v126 = vld [vmem:[#allocation8 + $0x108] sm:$0xff]
    %v127 = vld [vmem:[#allocation8 + $0x110] sm:$0xff]
    %v128 = vld [vmem:[#allocation8 + $0x118] sm:$0xff]
    %v129 = vld [vmem:[#allocation8 + $0x120] sm:$0xff]
    %v130 = vld [vmem:[#allocation8 + $0x128] sm:$0xff]
    %v131 = vld [vmem:[#allocation8 + $0x130] sm:$0xff]
    %v132 = vld [vmem:[#allocation8 + $0x138] sm:$0xff]
    %v133 = vld [vmem:[#allocation8 + $0x140] sm:$0xff]
    %v134 = vld [vmem:[#allocation8 + $0x148] sm:$0xff]
    %v135 = vld [vmem:[#allocation8 + $0x150] sm:$0xff]
    %v136 = vld [vmem:[#allocation8 + $0x158] sm:$0xff]
    %v137 = vld [vmem:[#allocation8 + $0x160] sm:$0xff]
    %v138 = vld [vmem:[#allocation8 + $0x168] sm:$0xff]
    %v139 = vld [vmem:[#allocation8 + $0x170] sm:$0xff]
    %v140 = vld [vmem:[#allocation8 + $0x178] sm:$0xff]
    %v141 = vld [vmem:[#allocation8 + $0x180] sm:$0xff]
    %v142 = vld [vmem:[#allocation8 + $0x188] sm:$0xff]
    %v143 = vld [vmem:[#allocation8 + $0x190] sm:$0xff]
    %v144 = vld [vmem:[#allocation8 + $0x198] sm:$0xff]
    %v145 = vld [vmem:[#allocation8 + $0x1a0] sm:$0xff]
    %v146 = vld [vmem:[#allocation8 + $0x1a8] sm:$0xff]
    %v147 = vld [vmem:[#allocation8 + $0x1b0] sm:$0xff]
    %v148 = vld [vmem:[#allocation8 + $0x1b8] sm:$0xff]
    %v149 = vld [vmem:[#allocation8 + $0x1c0] sm:$0xff]
    %v150 = vld [vmem:[#allocation8 + $0x1c8] sm:$0xff]
    %v151 = vld [vmem:[#allocation8 + $0x1d0] sm:$0xff]
    %v152 = vld [vmem:[#allocation8 + $0x1d8] sm:$0xff]
    %v153 = vld [vmem:[#allocation8 + $0x1e0] sm:$0xff]
    %v154 = vld [vmem:[#allocation8 + $0x1e8] sm:$0xff]
    %v155 = vld [vmem:[#allocation8 + $0x1f0] sm:$0xff]
    %v156 = vld [vmem:[#allocation8 + $0x1f8] sm:$0xff]
    %v157 = vld [vmem:[%s3] sm:$0xf]
    %v159 = vlaneseq
    %v160 = vshrl.u32 %v159, 7
    %v161 = vsub.s32 0, %v160
    %v162 = vrot.slane %v157, %v161
    %v163 = vlaneseq
    %v164 = vshrl.u32 %v163, 7
    %v165 = vsub.s32 1, %v164
    %v166 = vrot.slane %v157, %v165
    %v167 = vlaneseq
    %v168 = vshrl.u32 %v167, 7
    %v169 = vsub.s32 2, %v168
    %v170 = vrot.slane %v157, %v169
    %v171 = vlaneseq
    %v172 = vshrl.u32 %v171, 7
    %v173 = vsub.s32 3, %v172
    %v174 = vrot.slane %v157, %v173
    %179 = vmatprep.subr.mxu0 %v154
    %180 = vmatpush1.msra.mxu0 %v153
    %181 = vmatprep.subr.mxu0 %v150
    %182 = vmatpush1.msra.mxu0 %v149
    %183 = vmatprep.subr.mxu0 %v146
    %184 = vmatpush1.msra.mxu0 %v145
    %185 = vmatprep.subr.mxu0 %v142
    %186 = vmatpush1.msra.mxu0 %v141
    %187 = vmatprep.subr.mxu0 %v138
    %188 = vmatpush1.msra.mxu0 %v137
    %189 = vmatprep.subr.mxu0 %v134
    %190 = vmatpush1.msra.mxu0 %v133
    %191 = vmatprep.subr.mxu0 %v130
    %192 = vmatpush1.msra.mxu0 %v129
    %193 = vmatprep.subr.mxu0 %v126
    %194 = vmatpush1.msra.mxu0 %v125
    %195 = vmatprep.subr.mxu0 %v122
    %196 = vmatpush1.msra.mxu0 %v121
    %197 = vmatprep.subr.mxu0 %v118
    %198 = vmatpush1.msra.mxu0 %v117
    %199 = vmatprep.subr.mxu0 %v114
    %200 = vmatpush1.msra.mxu0 %v113
    %201 = vmatprep.subr.mxu0 %v110
    %202 = vmatpush1.msra.mxu0 %v109
    %203 = vmatprep.subr.mxu0 %v106
    %204 = vmatpush1.msra.mxu0 %v105
    %205 = vmatprep.subr.mxu0 %v102
    %206 = vmatpush1.msra.mxu0 %v101
    %207 = vmatprep.subr.mxu0 %v98
    %208 = vmatpush1.msra.mxu0 %v97
    %209 = vmatprep.subr.mxu0 %v94
    %210 = vmatpush1.msra.mxu0 %v93
    %211 = vmatprep.subr.mxu0 0.0
    %212 = vmatpush2.msra.mxu0 0.0
    %213 = vmatprep.subr.mxu0 0.0
    %214 = vmatpush2.msra.mxu0 0.0
    %215 = vmatprep.subr.mxu0 0.0
    %216 = vmatpush2.msra.mxu0 0.0
    %217 = vmatprep.subr.mxu0 0.0
    %218 = vmatpush2.msra.mxu0 0.0
    %219 = vmatprep.subr.mxu0 0.0
    %220 = vmatpush2.msra.mxu0 0.0
    %221 = vmatprep.subr.mxu0 0.0
    %222 = vmatpush2.msra.mxu0 0.0
    %223 = vmatprep.subr.mxu0 0.0
    %224 = vmatpush2.msra.mxu0 0.0
    %225 = vmatprep.subr.mxu0 0.0
    %226 = vmatpush2.msra.mxu0 0.0
    %227 = vmatprep.subr.mxu0 0.0
    %228 = vmatpush2.msra.mxu0 0.0
    %229 = vmatprep.subr.mxu0 0.0
    %230 = vmatpush2.msra.mxu0 0.0
    %231 = vmatprep.subr.mxu0 0.0
    %232 = vmatpush2.msra.mxu0 0.0
    %233 = vmatprep.subr.mxu0 0.0
    %234 = vmatpush2.msra.mxu0 0.0
    %235 = vmatprep.subr.mxu0 0.0
    %236 = vmatpush2.msra.mxu0 0.0
    %237 = vmatprep.subr.mxu0 0.0
    %238 = vmatpush2.msra.mxu0 0.0
    %239 = vmatprep.subr.mxu0 0.0
    %240 = vmatpush2.msra.mxu0 0.0
    %241 = vmatprep.subr.mxu0 0.0
    %242 = vmatpush2.msra.mxu0 0.0
    %243 = vmatprep.mubr.f32.mxu0 0.0
    %244 = vmatmul.mubr.f32.gmra.mxu0 %v85
    %v245 = vpop.f32.mrf.mxu0
    %v246 = vadd.f32 %v162, %v245
    %v247 = vpop.f32.mrf.mxu0
    %v248 = vadd.f32 %v166, %v247
    %249 = vmatprep.mubr.f32.mxu0 0.0
    %250 = vmatmul.mubr.f32.gmra.mxu0 %v86
    %v251 = vpop.f32.mrf.mxu0
    %v252 = vadd.f32 %v162, %v251
    %v253 = vpop.f32.mrf.mxu0
    %v254 = vadd.f32 %v166, %v253
    %255 = vmatprep.mubr.f32.mxu0 0.0
    %256 = vmatmul.mubr.f32.gmra.mxu0 %v87
    %v257 = vpop.f32.mrf.mxu0
    %v258 = vadd.f32 %v162, %v257
    %v259 = vpop.f32.mrf.mxu0
    %v260 = vadd.f32 %v166, %v259
    %261 = vmatprep.mubr.f32.mxu0 0.0
    %262 = vmatmul.mubr.f32.gmra.mxu0 %v88
    %v263 = vpop.f32.mrf.mxu0
    %v264 = vadd.f32 %v162, %v263
    %v265 = vpop.f32.mrf.mxu0
    %v266 = vadd.f32 %v166, %v265
    %267 = vmatprep.mubr.f32.mxu0 0.0
    %268 = vmatmul.mubr.f32.gmra.mxu0 %v89
    %v269 = vpop.f32.mrf.mxu0
    %v270 = vadd.f32 %v162, %v269
    %v271 = vpop.f32.mrf.mxu0
    %v272 = vadd.f32 %v166, %v271
    %273 = vmatprep.mubr.f32.mxu0 0.0
    %274 = vmatmul.mubr.f32.gmra.mxu0 %v90
    %v275 = vpop.f32.mrf.mxu0
    %v276 = vadd.f32 %v162, %v275
    %v277 = vpop.f32.mrf.mxu0
    %v278 = vadd.f32 %v166, %v277
    %279 = vmatprep.mubr.f32.mxu0 0.0
    %280 = vmatmul.mubr.f32.gmra.mxu0 %v91
    %v281 = vpop.f32.mrf.mxu0
    %v282 = vadd.f32 %v162, %v281
    %v283 = vpop.f32.mrf.mxu0
    %v284 = vadd.f32 %v166, %v283
    %285 = vmatprep.mubr.f32.mxu0 0.0
    %286 = vmatmul.mubr.f32.gmra.mxu0 %v92
    %v287 = vpop.f32.mrf.mxu0
    %v288 = vadd.f32 %v162, %v287
    %v289 = vpop.f32.mrf.mxu0
    %v290 = vadd.f32 %v166, %v289
    %291 = vdwg.mxu0
    %292 = vmatprep.subr.mxu0 %v156
    %293 = vmatpush1.msra.mxu0 %v155
    %294 = vmatprep.subr.mxu0 %v152
    %295 = vmatpush1.msra.mxu0 %v151
    %296 = vmatprep.subr.mxu0 %v148
    %297 = vmatpush1.msra.mxu0 %v147
    %298 = vmatprep.subr.mxu0 %v144
    %299 = vmatpush1.msra.mxu0 %v143
    %300 = vmatprep.subr.mxu0 %v140
    %301 = vmatpush1.msra.mxu0 %v139
    %302 = vmatprep.subr.mxu0 %v136
    %303 = vmatpush1.msra.mxu0 %v135
    %304 = vmatprep.subr.mxu0 %v132
    %305 = vmatpush1.msra.mxu0 %v131
    %306 = vmatprep.subr.mxu0 %v128
    %307 = vmatpush1.msra.mxu0 %v127
    %308 = vmatprep.subr.mxu0 %v124
    %309 = vmatpush1.msra.mxu0 %v123
    %310 = vmatprep.subr.mxu0 %v120
    %311 = vmatpush1.msra.mxu0 %v119
    %312 = vmatprep.subr.mxu0 %v116
    %313 = vmatpush1.msra.mxu0 %v115
    %314 = vmatprep.subr.mxu0 %v112
    %315 = vmatpush1.msra.mxu0 %v111
    %316 = vmatprep.subr.mxu0 %v108
    %317 = vmatpush1.msra.mxu0 %v107
    %318 = vmatprep.subr.mxu0 %v104
    %319 = vmatpush1.msra.mxu0 %v103
    %320 = vmatprep.subr.mxu0 %v100
    %321 = vmatpush1.msra.mxu0 %v99
    %322 = vmatprep.subr.mxu0 %v96
    %323 = vmatpush1.msra.mxu0 %v95
    %324 = vmatprep.subr.mxu0 0.0
    %325 = vmatpush2.msra.mxu0 0.0
    %326 = vmatprep.subr.mxu0 0.0
    %327 = vmatpush2.msra.mxu0 0.0
    %328 = vmatprep.subr.mxu0 0.0
    %329 = vmatpush2.msra.mxu0 0.0
    %330 = vmatprep.subr.mxu0 0.0
    %331 = vmatpush2.msra.mxu0 0.0
    %332 = vmatprep.subr.mxu0 0.0
    %333 = vmatpush2.msra.mxu0 0.0
    %334 = vmatprep.subr.mxu0 0.0
    %335 = vmatpush2.msra.mxu0 0.0
    %336 = vmatprep.subr.mxu0 0.0
    %337 = vmatpush2.msra.mxu0 0.0
    %338 = vmatprep.subr.mxu0 0.0
    %339 = vmatpush2.msra.mxu0 0.0
    %340 = vmatprep.subr.mxu0 0.0
    %341 = vmatpush2.msra.mxu0 0.0
    %342 = vmatprep.subr.mxu0 0.0
    %343 = vmatpush2.msra.mxu0 0.0
    %344 = vmatprep.subr.mxu0 0.0
    %345 = vmatpush2.msra.mxu0 0.0
    %346 = vmatprep.subr.mxu0 0.0
    %347 = vmatpush2.msra.mxu0 0.0
    %348 = vmatprep.subr.mxu0 0.0
    %349 = vmatpush2.msra.mxu0 0.0
    %350 = vmatprep.subr.mxu0 0.0
    %351 = vmatpush2.msra.mxu0 0.0
    %352 = vmatprep.subr.mxu0 0.0
    %353 = vmatpush2.msra.mxu0 0.0
    %354 = vmatprep.subr.mxu0 0.0
    %355 = vmatpush2.msra.mxu0 0.0
    %356 = vmatprep.mubr.f32.mxu0 0.0
    %357 = vmatmul.mubr.f32.gmra.mxu0 %v85
    %v358 = vpop.f32.mrf.mxu0
    %v359 = vadd.f32 %v170, %v358
    %v360 = vpop.f32.mrf.mxu0
    %v361 = vadd.f32 %v174, %v360
    %362 = vmatprep.mubr.f32.mxu0 0.0
    %363 = vmatmul.mubr.f32.gmra.mxu0 %v86
    %v364 = vpop.f32.mrf.mxu0
    %v365 = vadd.f32 %v170, %v364
    %v366 = vpop.f32.mrf.mxu0
    %v367 = vadd.f32 %v174, %v366
    %368 = vmatprep.mubr.f32.mxu0 0.0
    %369 = vmatmul.mubr.f32.gmra.mxu0 %v87
    %v370 = vpop.f32.mrf.mxu0
    %v371 = vadd.f32 %v170, %v370
    %v372 = vpop.f32.mrf.mxu0
    %v373 = vadd.f32 %v174, %v372
    %374 = vmatprep.mubr.f32.mxu0 0.0
    %375 = vmatmul.mubr.f32.gmra.mxu0 %v88
    %v376 = vpop.f32.mrf.mxu0
    %v377 = vadd.f32 %v170, %v376
    %v378 = vpop.f32.mrf.mxu0
    %v379 = vadd.f32 %v174, %v378
    %380 = vmatprep.mubr.f32.mxu0 0.0
    %381 = vmatmul.mubr.f32.gmra.mxu0 %v89
    %v382 = vpop.f32.mrf.mxu0
    %v383 = vadd.f32 %v170, %v382
    %v384 = vpop.f32.mrf.mxu0
    %v385 = vadd.f32 %v174, %v384
    %386 = vmatprep.mubr.f32.mxu0 0.0
    %387 = vmatmul.mubr.f32.gmra.mxu0 %v90
    %v388 = vpop.f32.mrf.mxu0
    %v389 = vadd.f32 %v170, %v388
    %v390 = vpop.f32.mrf.mxu0
    %v391 = vadd.f32 %v174, %v390
    %392 = vmatprep.mubr.f32.mxu0 0.0
    %393 = vmatmul.mubr.f32.gmra.mxu0 %v91
    %v394 = vpop.f32.mrf.mxu0
    %v395 = vadd.f32 %v170, %v394
    %v396 = vpop.f32.mrf.mxu0
    %v397 = vadd.f32 %v174, %v396
    %398 = vmatprep.mubr.f32.mxu0 0.0
    %399 = vmatmul.mubr.f32.gmra.mxu0 %v92
    %v400 = vpop.f32.mrf.mxu0
    %v401 = vadd.f32 %v170, %v400
    %v402 = vpop.f32.mrf.mxu0
    %v403 = vadd.f32 %v174, %v402
    %404 = vdwg.mxu0
    %405 = vst [vmem:[#allocation4] sm:$0xff] %v246
    %406 = vst [vmem:[#allocation4 + $0x8] sm:$0xff] %v248
    %407 = vst [vmem:[#allocation4 + $0x10] sm:$0xff] %v359
    %408 = vst [vmem:[#allocation4 + $0x18] sm:$0xff] %v361
    %409 = vst [vmem:[#allocation4 + $0x20] sm:$0xff] %v252
    %410 = vst [vmem:[#allocation4 + $0x28] sm:$0xff] %v254
    %411 = vst [vmem:[#allocation4 + $0x30] sm:$0xff] %v365
    %412 = vst [vmem:[#allocation4 + $0x38] sm:$0xff] %v367
    %413 = vst [vmem:[#allocation4 + $0x40] sm:$0xff] %v258
    %414 = vst [vmem:[#allocation4 + $0x48] sm:$0xff] %v260
    %415 = vst [vmem:[#allocation4 + $0x50] sm:$0xff] %v371
    %416 = vst [vmem:[#allocation4 + $0x58] sm:$0xff] %v373
    %417 = vst [vmem:[#allocation4 + $0x60] sm:$0xff] %v264
    %418 = vst [vmem:[#allocation4 + $0x68] sm:$0xff] %v266
    %419 = vst [vmem:[#allocation4 + $0x70] sm:$0xff] %v377
    %420 = vst [vmem:[#allocation4 + $0x78] sm:$0xff] %v379
    %421 = vst [vmem:[#allocation4 + $0x80] sm:$0xff] %v270
    %422 = vst [vmem:[#allocation4 + $0x88] sm:$0xff] %v272
    %423 = vst [vmem:[#allocation4 + $0x90] sm:$0xff] %v383
    %424 = vst [vmem:[#allocation4 + $0x98] sm:$0xff] %v385
    %425 = vst [vmem:[#allocation4 + $0xa0] sm:$0xff] %v276
    %426 = vst [vmem:[#allocation4 + $0xa8] sm:$0xff] %v278
    %427 = vst [vmem:[#allocation4 + $0xb0] sm:$0xff] %v389
    %428 = vst [vmem:[#allocation4 + $0xb8] sm:$0xff] %v391
    %429 = vst [vmem:[#allocation4 + $0xc0] sm:$0xff] %v282
    %430 = vst [vmem:[#allocation4 + $0xc8] sm:$0xff] %v284
    %431 = vst [vmem:[#allocation4 + $0xd0] sm:$0xff] %v395
    %432 = vst [vmem:[#allocation4 + $0xd8] sm:$0xff] %v397
    %433 = vst [vmem:[#allocation4 + $0xe0] sm:$0xff] %v288
    %434 = vst [vmem:[#allocation4 + $0xe8] sm:$0xff] %v290
    %435 = vst [vmem:[#allocation4 + $0xf0] sm:$0xff] %v401
    %436 = vst [vmem:[#allocation4 + $0xf8] sm:$0xff] %v403
    %v437 = vld [vmem:[#allocation10] sm:$0xff]
    %v438 = vld [vmem:[#allocation10 + $0x8] sm:$0xff]
    %v439 = vld [vmem:[#allocation10 + $0x10] sm:$0xff]
    %v440 = vld [vmem:[#allocation10 + $0x18] sm:$0xff]
    %v441 = vld [vmem:[#allocation10 + $0x20] sm:$0xff]
    %v442 = vld [vmem:[#allocation10 + $0x28] sm:$0xff]
    %v443 = vld [vmem:[#allocation10 + $0x30] sm:$0xff]
    %v444 = vld [vmem:[#allocation10 + $0x38] sm:$0xff]
    %v445 = vld [vmem:[#allocation10 + $0x40] sm:$0xff]
    %v446 = vld [vmem:[#allocation10 + $0x48] sm:$0xff]
    %v447 = vld [vmem:[#allocation10 + $0x50] sm:$0xff]
    %v448 = vld [vmem:[#allocation10 + $0x58] sm:$0xff]
    %v449 = vld [vmem:[#allocation10 + $0x60] sm:$0xff]
    %v450 = vld [vmem:[#allocation10 + $0x68] sm:$0xff]
    %v451 = vld [vmem:[#allocation10 + $0x70] sm:$0xff]
    %v452 = vld [vmem:[#allocation10 + $0x78] sm:$0xff]
    %v453 = vld [vmem:[#allocation10 + $0x80] sm:$0xff]
    %v454 = vld [vmem:[#allocation10 + $0x88] sm:$0xff]
    %v455 = vld [vmem:[#allocation10 + $0x90] sm:$0xff]
    %v456 = vld [vmem:[#allocation10 + $0x98] sm:$0xff]
    %v457 = vld [vmem:[#allocation10 + $0xa0] sm:$0xff]
    %v458 = vld [vmem:[#allocation10 + $0xa8] sm:$0xff]
    %v459 = vld [vmem:[#allocation10 + $0xb0] sm:$0xff]
    %v460 = vld [vmem:[#allocation10 + $0xb8] sm:$0xff]
    %v461 = vld [vmem:[#allocation10 + $0xc0] sm:$0xff]
    %v462 = vld [vmem:[#allocation10 + $0xc8] sm:$0xff]
    %v463 = vld [vmem:[#allocation10 + $0xd0] sm:$0xff]
    %v464 = vld [vmem:[#allocation10 + $0xd8] sm:$0xff]
    %v465 = vld [vmem:[#allocation10 + $0xe0] sm:$0xff]
    %v466 = vld [vmem:[#allocation10 + $0xe8] sm:$0xff]
    %v467 = vld [vmem:[#allocation10 + $0xf0] sm:$0xff]
    %v468 = vld [vmem:[#allocation10 + $0xf8] sm:$0xff]
    %v469 = vld [vmem:[#allocation10 + $0x100] sm:$0xff]
    %v470 = vld [vmem:[#allocation10 + $0x108] sm:$0xff]
    %v471 = vld [vmem:[#allocation10 + $0x110] sm:$0xff]
    %v472 = vld [vmem:[#allocation10 + $0x118] sm:$0xff]
    %v473 = vld [vmem:[#allocation10 + $0x120] sm:$0xff]
    %v474 = vld [vmem:[#allocation10 + $0x128] sm:$0xff]
    %v475 = vld [vmem:[#allocation10 + $0x130] sm:$0xff]
    %v476 = vld [vmem:[#allocation10 + $0x138] sm:$0xff]
    %v477 = vld [vmem:[#allocation10 + $0x140] sm:$0xff]
    %v478 = vld [vmem:[#allocation10 + $0x148] sm:$0xff]
    %v479 = vld [vmem:[#allocation10 + $0x150] sm:$0xff]
    %v480 = vld [vmem:[#allocation10 + $0x158] sm:$0xff]
    %v481 = vld [vmem:[#allocation10 + $0x160] sm:$0xff]
    %v482 = vld [vmem:[#allocation10 + $0x168] sm:$0xff]
    %v483 = vld [vmem:[#allocation10 + $0x170] sm:$0xff]
    %v484 = vld [vmem:[#allocation10 + $0x178] sm:$0xff]
    %v485 = vld [vmem:[#allocation10 + $0x180] sm:$0xff]
    %v486 = vld [vmem:[#allocation10 + $0x188] sm:$0xff]
    %v487 = vld [vmem:[#allocation10 + $0x190] sm:$0xff]
    %v488 = vld [vmem:[#allocation10 + $0x198] sm:$0xff]
    %v489 = vld [vmem:[#allocation10 + $0x1a0] sm:$0xff]
    %v490 = vld [vmem:[#allocation10 + $0x1a8] sm:$0xff]
    %v491 = vld [vmem:[#allocation10 + $0x1b0] sm:$0xff]
    %v492 = vld [vmem:[#allocation10 + $0x1b8] sm:$0xff]
    %v493 = vld [vmem:[#allocation10 + $0x1c0] sm:$0xff]
    %v494 = vld [vmem:[#allocation10 + $0x1c8] sm:$0xff]
    %v495 = vld [vmem:[#allocation10 + $0x1d0] sm:$0xff]
    %v496 = vld [vmem:[#allocation10 + $0x1d8] sm:$0xff]
    %v497 = vld [vmem:[#allocation10 + $0x1e0] sm:$0xff]
    %v498 = vld [vmem:[#allocation10 + $0x1e8] sm:$0xff]
    %v499 = vld [vmem:[#allocation10 + $0x1f0] sm:$0xff]
    %v500 = vld [vmem:[#allocation10 + $0x1f8] sm:$0xff]
    %s501 = smul.u32 0, 4
    %s502 = smul.addr %s501, 8
    %s503 = scalar_lea.vmem [#allocation4], %s502
    %v504 = vld [vmem:[%s503] sm:$0xff]
    %v505 = vld [vmem:[%s503 + $0x8] sm:$0xff]
    %v506 = vld [vmem:[%s503 + $0x10] sm:$0xff]
    %v507 = vld [vmem:[%s503 + $0x18] sm:$0xff]
    %v508 = vld [vmem:[#allocation2] sm:$0xff]
    %509 = vmatprep.subr.mxu0 %v498
    %510 = vmatpush1.msra.mxu0 %v497
    %511 = vmatprep.subr.mxu0 %v494
    %512 = vmatpush1.msra.mxu0 %v493
    %513 = vmatprep.subr.mxu0 %v490
    %514 = vmatpush1.msra.mxu0 %v489
    %515 = vmatprep.subr.mxu0 %v486
    %516 = vmatpush1.msra.mxu0 %v485
    %517 = vmatprep.subr.mxu0 %v482
    %518 = vmatpush1.msra.mxu0 %v481
    %519 = vmatprep.subr.mxu0 %v478
    %520 = vmatpush1.msra.mxu0 %v477
    %521 = vmatprep.subr.mxu0 %v474
    %522 = vmatpush1.msra.mxu0 %v473
    %523 = vmatprep.subr.mxu0 %v470
    %524 = vmatpush1.msra.mxu0 %v469
    %525 = vmatprep.subr.mxu0 %v466
    %526 = vmatpush1.msra.mxu0 %v465
    %527 = vmatprep.subr.mxu0 %v462
    %528 = vmatpush1.msra.mxu0 %v461
    %529 = vmatprep.subr.mxu0 %v458
    %530 = vmatpush1.msra.mxu0 %v457
    %531 = vmatprep.subr.mxu0 %v454
    %532 = vmatpush1.msra.mxu0 %v453
    %533 = vmatprep.subr.mxu0 %v450
    %534 = vmatpush1.msra.mxu0 %v449
    %535 = vmatprep.subr.mxu0 %v446
    %536 = vmatpush1.msra.mxu0 %v445
    %537 = vmatprep.subr.mxu0 %v442
    %538 = vmatpush1.msra.mxu0 %v441
    %539 = vmatprep.subr.mxu0 %v438
    %540 = vmatpush1.msra.mxu0 %v437
    %541 = vmatprep.subr.mxu0 0.0
    %542 = vmatpush2.msra.mxu0 0.0
    %543 = vmatprep.subr.mxu0 0.0
    %544 = vmatpush2.msra.mxu0 0.0
    %545 = vmatprep.subr.mxu0 0.0
    %546 = vmatpush2.msra.mxu0 0.0
    %547 = vmatprep.subr.mxu0 0.0
    %548 = vmatpush2.msra.mxu0 0.0
    %549 = vmatprep.subr.mxu0 0.0
    %550 = vmatpush2.msra.mxu0 0.0
    %551 = vmatprep.subr.mxu0 0.0
    %552 = vmatpush2.msra.mxu0 0.0
    %553 = vmatprep.subr.mxu0 0.0
    %554 = vmatpush2.msra.mxu0 0.0
    %555 = vmatprep.subr.mxu0 0.0
    %556 = vmatpush2.msra.mxu0 0.0
    %557 = vmatprep.subr.mxu0 0.0
    %558 = vmatpush2.msra.mxu0 0.0
    %559 = vmatprep.subr.mxu0 0.0
    %560 = vmatpush2.msra.mxu0 0.0
    %561 = vmatprep.subr.mxu0 0.0
    %562 = vmatpush2.msra.mxu0 0.0
    %563 = vmatprep.subr.mxu0 0.0
    %564 = vmatpush2.msra.mxu0 0.0
    %565 = vmatprep.subr.mxu0 0.0
    %566 = vmatpush2.msra.mxu0 0.0
    %567 = vmatprep.subr.mxu0 0.0
    %568 = vmatpush2.msra.mxu0 0.0
    %569 = vmatprep.subr.mxu0 0.0
    %570 = vmatpush2.msra.mxu0 0.0
    %571 = vmatprep.subr.mxu0 0.0
    %572 = vmatpush2.msra.mxu0 0.0
    %573 = vmatprep.mubr.f32.mxu0 0.0
    %574 = vmatmul.mubr.f32.gmra.mxu0 %v508
    %v575 = vpop.f32.mrf.mxu0
    %v576 = vadd.f32 0.0, %v575
    %v577 = vpop.f32.mrf.mxu0
    %v578 = vadd.f32 0.0, %v577
    %579 = vdwg.mxu0
    %580 = vmatprep.subr.mxu0 %v500
    %581 = vmatpush1.msra.mxu0 %v499
    %582 = vmatprep.subr.mxu0 %v496
    %583 = vmatpush1.msra.mxu0 %v495
    %584 = vmatprep.subr.mxu0 %v492
    %585 = vmatpush1.msra.mxu0 %v491
    %586 = vmatprep.subr.mxu0 %v488
    %587 = vmatpush1.msra.mxu0 %v487
    %588 = vmatprep.subr.mxu0 %v484
    %589 = vmatpush1.msra.mxu0 %v483
    %590 = vmatprep.subr.mxu0 %v480
    %591 = vmatpush1.msra.mxu0 %v479
    %592 = vmatprep.subr.mxu0 %v476
    %593 = vmatpush1.msra.mxu0 %v475
    %594 = vmatprep.subr.mxu0 %v472
    %595 = vmatpush1.msra.mxu0 %v471
    %596 = vmatprep.subr.mxu0 %v468
    %597 = vmatpush1.msra.mxu0 %v467
    %598 = vmatprep.subr.mxu0 %v464
    %599 = vmatpush1.msra.mxu0 %v463
    %600 = vmatprep.subr.mxu0 %v460
    %601 = vmatpush1.msra.mxu0 %v459
    %602 = vmatprep.subr.mxu0 %v456
    %603 = vmatpush1.msra.mxu0 %v455
    %604 = vmatprep.subr.mxu0 %v452
    %605 = vmatpush1.msra.mxu0 %v451
    %606 = vmatprep.subr.mxu0 %v448
    %607 = vmatpush1.msra.mxu0 %v447
    %608 = vmatprep.subr.mxu0 %v444
    %609 = vmatpush1.msra.mxu0 %v443
    %610 = vmatprep.subr.mxu0 %v440
    %611 = vmatpush1.msra.mxu0 %v439
    %612 = vmatprep.subr.mxu0 0.0
    %613 = vmatpush2.msra.mxu0 0.0
    %614 = vmatprep.subr.mxu0 0.0
    %615 = vmatpush2.msra.mxu0 0.0
    %616 = vmatprep.subr.mxu0 0.0
    %617 = vmatpush2.msra.mxu0 0.0
    %618 = vmatprep.subr.mxu0 0.0
    %619 = vmatpush2.msra.mxu0 0.0
    %620 = vmatprep.subr.mxu0 0.0
    %621 = vmatpush2.msra.mxu0 0.0
    %622 = vmatprep.subr.mxu0 0.0
    %623 = vmatpush2.msra.mxu0 0.0
    %624 = vmatprep.subr.mxu0 0.0
    %625 = vmatpush2.msra.mxu0 0.0
    %626 = vmatprep.subr.mxu0 0.0
    %627 = vmatpush2.msra.mxu0 0.0
    %628 = vmatprep.subr.mxu0 0.0
    %629 = vmatpush2.msra.mxu0 0.0
    %630 = vmatprep.subr.mxu0 0.0
    %631 = vmatpush2.msra.mxu0 0.0
    %632 = vmatprep.subr.mxu0 0.0
    %633 = vmatpush2.msra.mxu0 0.0
    %634 = vmatprep.subr.mxu0 0.0
    %635 = vmatpush2.msra.mxu0 0.0
    %636 = vmatprep.subr.mxu0 0.0
    %637 = vmatpush2.msra.mxu0 0.0
    %638 = vmatprep.subr.mxu0 0.0
    %639 = vmatpush2.msra.mxu0 0.0
    %640 = vmatprep.subr.mxu0 0.0
    %641 = vmatpush2.msra.mxu0 0.0
    %642 = vmatprep.subr.mxu0 0.0
    %643 = vmatpush2.msra.mxu0 0.0
    %644 = vmatprep.mubr.f32.mxu0 0.0
    %645 = vmatmul.mubr.f32.gmra.mxu0 %v508
    %v646 = vpop.f32.mrf.mxu0
    %v647 = vadd.f32 0.0, %v646
    %v648 = vpop.f32.mrf.mxu0
    %v649 = vadd.f32 0.0, %v648
    %650 = vdwg.mxu0
    %v651 = vadd.f32 %v504, %v576
    %v652 = vadd.f32 %v505, %v578
    %v653 = vadd.f32 %v506, %v647
    %v654 = vadd.f32 %v507, %v649
    %v655 = vxor.u32 %v651, 2147483648
    %v656 = vmul.f32 %v655, 1.442695
    %v657 = vpow.pop %v656
    %v658 = vadd.f32 %v657, 1.0
    %v659 = vrcp.pop %v658
    %v660 = vmul.f32 1.0, %v659
    %v661 = vxor.u32 %v652, 2147483648
    %v662 = vmul.f32 %v661, 1.442695
    %v663 = vpow.pop %v662
    %v664 = vadd.f32 %v663, 1.0
    %v665 = vrcp.pop %v664
    %v666 = vmul.f32 1.0, %v665
    %v667 = vtanh.pop %v653
    %v668 = vxor.u32 %v654, 2147483648
    %v669 = vmul.f32 %v668, 1.442695
    %v670 = vpow.pop %v669
    %v671 = vadd.f32 %v670, 1.0
    %v672 = vrcp.pop %v671
    %v673 = vmul.f32 1.0, %v672
    %v674 = vld [vmem:[#allocation3] sm:$0xff]
    %v675 = vmul.f32 %v666, %v674
    %v676 = vmul.f32 %v660, %v667
    %v677 = vadd.f32 %v675, %v676
    %v678 = vtanh.pop %v677
    %v679 = vmul.f32 %v673, %v678
    %680 = vst [vmem:[#allocation3] sm:$0xff] %v677
    %681 = vst [vmem:[#allocation2] sm:$0xff] %v679
    %s682 = smul.u32 1, 4
    %s683 = smul.addr %s682, 8
    %s684 = scalar_lea.vmem [#allocation4], %s683
    %v685 = vld [vmem:[%s684] sm:$0xff]
    %v686 = vld [vmem:[%s684 + $0x8] sm:$0xff]
    %v687 = vld [vmem:[%s684 + $0x10] sm:$0xff]
    %v688 = vld [vmem:[%s684 + $0x18] sm:$0xff]
    %v689 = vld [vmem:[#allocation2] sm:$0xff]
    %690 = vmatprep.subr.mxu0 %v498
    %691 = vmatpush1.msra.mxu0 %v497
    %692 = vmatprep.subr.mxu0 %v494
    %693 = vmatpush1.msra.mxu0 %v493
    %694 = vmatprep.subr.mxu0 %v490
    %695 = vmatpush1.msra.mxu0 %v489
    %696 = vmatprep.subr.mxu0 %v486
    %697 = vmatpush1.msra.mxu0 %v485
    %698 = vmatprep.subr.mxu0 %v482
    %699 = vmatpush1.msra.mxu0 %v481
    %700 = vmatprep.subr.mxu0 %v478
    %701 = vmatpush1.msra.mxu0 %v477
    %702 = vmatprep.subr.mxu0 %v474
    %703 = vmatpush1.msra.mxu0 %v473
    %704 = vmatprep.subr.mxu0 %v470
    %705 = vmatpush1.msra.mxu0 %v469
    %706 = vmatprep.subr.mxu0 %v466
    %707 = vmatpush1.msra.mxu0 %v465
    %708 = vmatprep.subr.mxu0 %v462
    %709 = vmatpush1.msra.mxu0 %v461
    %710 = vmatprep.subr.mxu0 %v458
    %711 = vmatpush1.msra.mxu0 %v457
    %712 = vmatprep.subr.mxu0 %v454
    %713 = vmatpush1.msra.mxu0 %v453
    %714 = vmatprep.subr.mxu0 %v450
    %715 = vmatpush1.msra.mxu0 %v449
    %716 = vmatprep.subr.mxu0 %v446
    %717 = vmatpush1.msra.mxu0 %v445
    %718 = vmatprep.subr.mxu0 %v442
    %719 = vmatpush1.msra.mxu0 %v441
    %720 = vmatprep.subr.mxu0 %v438
    %721 = vmatpush1.msra.mxu0 %v437
    %722 = vmatprep.subr.mxu0 0.0
    %723 = vmatpush2.msra.mxu0 0.0
    %724 = vmatprep.subr.mxu0 0.0
    %725 = vmatpush2.msra.mxu0 0.0
    %726 = vmatprep.subr.mxu0 0.0
    %727 = vmatpush2.msra.mxu0 0.0
    %728 = vmatprep.subr.mxu0 0.0
    %729 = vmatpush2.msra.mxu0 0.0
    %730 = vmatprep.subr.mxu0 0.0
    %731 = vmatpush2.msra.mxu0 0.0
    %732 = vmatprep.subr.mxu0 0.0
    %733 = vmatpush2.msra.mxu0 0.0
    %734 = vmatprep.subr.mxu0 0.0
    %735 = vmatpush2.msra.mxu0 0.0
    %736 = vmatprep.subr.mxu0 0.0
    %737 = vmatpush2.msra.mxu0 0.0
    %738 = vmatprep.subr.mxu0 0.0
    %739 = vmatpush2.msra.mxu0 0.0
    %740 = vmatprep.subr.mxu0 0.0
    %741 = vmatpush2.msra.mxu0 0.0
    %742 = vmatprep.subr.mxu0 0.0
    %743 = vmatpush2.msra.mxu0 0.0
    %744 = vmatprep.subr.mxu0 0.0
    %745 = vmatpush2.msra.mxu0 0.0
    %746 = vmatprep.subr.mxu0 0.0
    %747 = vmatpush2.msra.mxu0 0.0
    %748 = vmatprep.subr.mxu0 0.0
    %749 = vmatpush2.msra.mxu0 0.0
    %750 = vmatprep.subr.mxu0 0.0
    %751 = vmatpush2.msra.mxu0 0.0
    %752 = vmatprep.subr.mxu0 0.0
    %753 = vmatpush2.msra.mxu0 0.0
    %754 = vmatprep.mubr.f32.mxu0 0.0
    %755 = vmatmul.mubr.f32.gmra.mxu0 %v689
    %v756 = vpop.f32.mrf.mxu0
    %v757 = vadd.f32 0.0, %v756
    %v758 = vpop.f32.mrf.mxu0
    %v759 = vadd.f32 0.0, %v758
    %760 = vdwg.mxu0
    %761 = vmatprep.subr.mxu0 %v500
    %762 = vmatpush1.msra.mxu0 %v499
    %763 = vmatprep.subr.mxu0 %v496
    %764 = vmatpush1.msra.mxu0 %v495
    %765 = vmatprep.subr.mxu0 %v492
    %766 = vmatpush1.msra.mxu0 %v491
    %767 = vmatprep.subr.mxu0 %v488
    %768 = vmatpush1.msra.mxu0 %v487
    %769 = vmatprep.subr.mxu0 %v484
    %770 = vmatpush1.msra.mxu0 %v483
    %771 = vmatprep.subr.mxu0 %v480
    %772 = vmatpush1.msra.mxu0 %v479
    %773 = vmatprep.subr.mxu0 %v476
    %774 = vmatpush1.msra.mxu0 %v475
    %775 = vmatprep.subr.mxu0 %v472
    %776 = vmatpush1.msra.mxu0 %v471
    %777 = vmatprep.subr.mxu0 %v468
    %778 = vmatpush1.msra.mxu0 %v467
    %779 = vmatprep.subr.mxu0 %v464
    %780 = vmatpush1.msra.mxu0 %v463
    %781 = vmatprep.subr.mxu0 %v460
    %782 = vmatpush1.msra.mxu0 %v459
    %783 = vmatprep.subr.mxu0 %v456
    %784 = vmatpush1.msra.mxu0 %v455
    %785 = vmatprep.subr.mxu0 %v452
    %786 = vmatpush1.msra.mxu0 %v451
    %787 = vmatprep.subr.mxu0 %v448
    %788 = vmatpush1.msra.mxu0 %v447
    %789 = vmatprep.subr.mxu0 %v444
    %790 = vmatpush1.msra.mxu0 %v443
    %791 = vmatprep.subr.mxu0 %v440
    %792 = vmatpush1.msra.mxu0 %v439
    %793 = vmatprep.subr.mxu0 0.0
    %794 = vmatpush2.msra.mxu0 0.0
    %795 = vmatprep.subr.mxu0 0.0
    %796 = vmatpush2.msra.mxu0 0.0
    %797 = vmatprep.subr.mxu0 0.0
    %798 = vmatpush2.msra.mxu0 0.0
    %799 = vmatprep.subr.mxu0 0.0
    %800 = vmatpush2.msra.mxu0 0.0
    %801 = vmatprep.subr.mxu0 0.0
    %802 = vmatpush2.msra.mxu0 0.0
    %803 = vmatprep.subr.mxu0 0.0
    %804 = vmatpush2.msra.mxu0 0.0
    %805 = vmatprep.subr.mxu0 0.0
    %806 = vmatpush2.msra.mxu0 0.0
    %807 = vmatprep.subr.mxu0 0.0
    %808 = vmatpush2.msra.mxu0 0.0
    %809 = vmatprep.subr.mxu0 0.0
    %810 = vmatpush2.msra.mxu0 0.0
    %811 = vmatprep.subr.mxu0 0.0
    %812 = vmatpush2.msra.mxu0 0.0
    %813 = vmatprep.subr.mxu0 0.0
    %814 = vmatpush2.msra.mxu0 0.0
    %815 = vmatprep.subr.mxu0 0.0
    %816 = vmatpush2.msra.mxu0 0.0
    %817 = vmatprep.subr.mxu0 0.0
    %818 = vmatpush2.msra.mxu0 0.0
    %819 = vmatprep.subr.mxu0 0.0
    %820 = vmatpush2.msra.mxu0 0.0
    %821 = vmatprep.subr.mxu0 0.0
    %822 = vmatpush2.msra.mxu0 0.0
    %823 = vmatprep.subr.mxu0 0.0
    %824 = vmatpush2.msra.mxu0 0.0
    %825 = vmatprep.mubr.f32.mxu0 0.0
    %826 = vmatmul.mubr.f32.gmra.mxu0 %v689
    %v827 = vpop.f32.mrf.mxu0
    %v828 = vadd.f32 0.0, %v827
    %v829 = vpop.f32.mrf.mxu0
    %v830 = vadd.f32 0.0, %v829
    %831 = vdwg.mxu0
    %v832 = vadd.f32 %v685, %v757
    %v833 = vadd.f32 %v686, %v759
    %v834 = vadd.f32 %v687, %v828
    %v835 = vadd.f32 %v688, %v830
    %v836 = vxor.u32 %v832, 2147483648
    %v837 = vmul.f32 %v836, 1.442695
    %v838 = vpow.pop %v837
    %v839 = vadd.f32 %v838, 1.0
    %v840 = vrcp.pop %v839
    %v841 = vmul.f32 1.0, %v840
    %v842 = vxor.u32 %v833, 2147483648
    %v843 = vmul.f32 %v842, 1.442695
    %v844 = vpow.pop %v843
    %v845 = vadd.f32 %v844, 1.0
    %v846 = vrcp.pop %v845
    %v847 = vmul.f32 1.0, %v846
    %v848 = vtanh.pop %v834
    %v849 = vxor.u32 %v835, 2147483648
    %v850 = vmul.f32 %v849, 1.442695
    %v851 = vpow.pop %v850
    %v852 = vadd.f32 %v851, 1.0
    %v853 = vrcp.pop %v852
    %v854 = vmul.f32 1.0, %v853
    %v855 = vld [vmem:[#allocation3] sm:$0xff]
    %v856 = vmul.f32 %v847, %v855
    %v857 = vmul.f32 %v841, %v848
    %v858 = vadd.f32 %v856, %v857
    %v859 = vtanh.pop %v858
    %v860 = vmul.f32 %v854, %v859
    %861 = vst [vmem:[#allocation3] sm:$0xff] %v858
    %862 = vst [vmem:[#allocation2] sm:$0xff] %v860
    %s863 = smul.u32 2, 4
    %s864 = smul.addr %s863, 8
    %s865 = scalar_lea.vmem [#allocation4], %s864
    %v866 = vld [vmem:[%s865] sm:$0xff]
    %v867 = vld [vmem:[%s865 + $0x8] sm:$0xff]
    %v868 = vld [vmem:[%s865 + $0x10] sm:$0xff]
    %v869 = vld [vmem:[%s865 + $0x18] sm:$0xff]
    %v870 = vld [vmem:[#allocation2] sm:$0xff]
    %871 = vmatprep.subr.mxu0 %v498
    %872 = vmatpush1.msra.mxu0 %v497
    %873 = vmatprep.subr.mxu0 %v494
    %874 = vmatpush1.msra.mxu0 %v493
    %875 = vmatprep.subr.mxu0 %v490
    %876 = vmatpush1.msra.mxu0 %v489
    %877 = vmatprep.subr.mxu0 %v486
    %878 = vmatpush1.msra.mxu0 %v485
    %879 = vmatprep.subr.mxu0 %v482
    %880 = vmatpush1.msra.mxu0 %v481
    %881 = vmatprep.subr.mxu0 %v478
    %882 = vmatpush1.msra.mxu0 %v477
    %883 = vmatprep.subr.mxu0 %v474
    %884 = vmatpush1.msra.mxu0 %v473
    %885 = vmatprep.subr.mxu0 %v470
    %886 = vmatpush1.msra.mxu0 %v469
    %887 = vmatprep.subr.mxu0 %v466
    %888 = vmatpush1.msra.mxu0 %v465
    %889 = vmatprep.subr.mxu0 %v462
    %890 = vmatpush1.msra.mxu0 %v461
    %891 = vmatprep.subr.mxu0 %v458
    %892 = vmatpush1.msra.mxu0 %v457
    %893 = vmatprep.subr.mxu0 %v454
    %894 = vmatpush1.msra.mxu0 %v453
    %895 = vmatprep.subr.mxu0 %v450
    %896 = vmatpush1.msra.mxu0 %v449
    %897 = vmatprep.subr.mxu0 %v446
    %898 = vmatpush1.msra.mxu0 %v445
    %899 = vmatprep.subr.mxu0 %v442
    %900 = vmatpush1.msra.mxu0 %v441
    %901 = vmatprep.subr.mxu0 %v438
    %902 = vmatpush1.msra.mxu0 %v437
    %903 = vmatprep.subr.mxu0 0.0
    %904 = vmatpush2.msra.mxu0 0.0
    %905 = vmatprep.subr.mxu0 0.0
    %906 = vmatpush2.msra.mxu0 0.0
    %907 = vmatprep.subr.mxu0 0.0
    %908 = vmatpush2.msra.mxu0 0.0
    %909 = vmatprep.subr.mxu0 0.0
    %910 = vmatpush2.msra.mxu0 0.0
    %911 = vmatprep.subr.mxu0 0.0
    %912 = vmatpush2.msra.mxu0 0.0
    %913 = vmatprep.subr.mxu0 0.0
    %914 = vmatpush2.msra.mxu0 0.0
    %915 = vmatprep.subr.mxu0 0.0
    %916 = vmatpush2.msra.mxu0 0.0
    %917 = vmatprep.subr.mxu0 0.0
    %918 = vmatpush2.msra.mxu0 0.0
    %919 = vmatprep.subr.mxu0 0.0
    %920 = vmatpush2.msra.mxu0 0.0
    %921 = vmatprep.subr.mxu0 0.0
    %922 = vmatpush2.msra.mxu0 0.0
    %923 = vmatprep.subr.mxu0 0.0
    %924 = vmatpush2.msra.mxu0 0.0
    %925 = vmatprep.subr.mxu0 0.0
    %926 = vmatpush2.msra.mxu0 0.0
    %927 = vmatprep.subr.mxu0 0.0
    %928 = vmatpush2.msra.mxu0 0.0
    %929 = vmatprep.subr.mxu0 0.0
    %930 = vmatpush2.msra.mxu0 0.0
    %931 = vmatprep.subr.mxu0 0.0
    %932 = vmatpush2.msra.mxu0 0.0
    %933 = vmatprep.subr.mxu0 0.0
    %934 = vmatpush2.msra.mxu0 0.0
    %935 = vmatprep.mubr.f32.mxu0 0.0
    %936 = vmatmul.mubr.f32.gmra.mxu0 %v870
    %v937 = vpop.f32.mrf.mxu0
    %v938 = vadd.f32 0.0, %v937
    %v939 = vpop.f32.mrf.mxu0
    %v940 = vadd.f32 0.0, %v939
    %941 = vdwg.mxu0
    %942 = vmatprep.subr.mxu0 %v500
    %943 = vmatpush1.msra.mxu0 %v499
    %944 = vmatprep.subr.mxu0 %v496
    %945 = vmatpush1.msra.mxu0 %v495
    %946 = vmatprep.subr.mxu0 %v492
    %947 = vmatpush1.msra.mxu0 %v491
    %948 = vmatprep.subr.mxu0 %v488
    %949 = vmatpush1.msra.mxu0 %v487
    %950 = vmatprep.subr.mxu0 %v484
    %951 = vmatpush1.msra.mxu0 %v483
    %952 = vmatprep.subr.mxu0 %v480
    %953 = vmatpush1.msra.mxu0 %v479
    %954 = vmatprep.subr.mxu0 %v476
    %955 = vmatpush1.msra.mxu0 %v475
    %956 = vmatprep.subr.mxu0 %v472
    %957 = vmatpush1.msra.mxu0 %v471
    %958 = vmatprep.subr.mxu0 %v468
    %959 = vmatpush1.msra.mxu0 %v467
    %960 = vmatprep.subr.mxu0 %v464
    %961 = vmatpush1.msra.mxu0 %v463
    %962 = vmatprep.subr.mxu0 %v460
    %963 = vmatpush1.msra.mxu0 %v459
    %964 = vmatprep.subr.mxu0 %v456
    %965 = vmatpush1.msra.mxu0 %v455
    %966 = vmatprep.subr.mxu0 %v452
    %967 = vmatpush1.msra.mxu0 %v451
    %968 = vmatprep.subr.mxu0 %v448
    %969 = vmatpush1.msra.mxu0 %v447
    %970 = vmatprep.subr.mxu0 %v444
    %971 = vmatpush1.msra.mxu0 %v443
    %972 = vmatprep.subr.mxu0 %v440
    %973 = vmatpush1.msra.mxu0 %v439
    %974 = vmatprep.subr.mxu0 0.0
    %975 = vmatpush2.msra.mxu0 0.0
    %976 = vmatprep.subr.mxu0 0.0
    %977 = vmatpush2.msra.mxu0 0.0
    %978 = vmatprep.subr.mxu0 0.0
    %979 = vmatpush2.msra.mxu0 0.0
    %980 = vmatprep.subr.mxu0 0.0
    %981 = vmatpush2.msra.mxu0 0.0
    %982 = vmatprep.subr.mxu0 0.0
    %983 = vmatpush2.msra.mxu0 0.0
    %984 = vmatprep.subr.mxu0 0.0
    %985 = vmatpush2.msra.mxu0 0.0
    %986 = vmatprep.subr.mxu0 0.0
    %987 = vmatpush2.msra.mxu0 0.0
    %988 = vmatprep.subr.mxu0 0.0
    %989 = vmatpush2.msra.mxu0 0.0
    %990 = vmatprep.subr.mxu0 0.0
    %991 = vmatpush2.msra.mxu0 0.0
    %992 = vmatprep.subr.mxu0 0.0
    %993 = vmatpush2.msra.mxu0 0.0
    %994 = vmatprep.subr.mxu0 0.0
    %995 = vmatpush2.msra.mxu0 0.0
    %996 = vmatprep.subr.mxu0 0.0
    %997 = vmatpush2.msra.mxu0 0.0
    %998 = vmatprep.subr.mxu0 0.0
    %999 = vmatpush2.msra.mxu0 0.0
    %1000 = vmatprep.subr.mxu0 0.0
    %1001 = vmatpush2.msra.mxu0 0.0
    %1002 = vmatprep.subr.mxu0 0.0
    %1003 = vmatpush2.msra.mxu0 0.0
    %1004 = vmatprep.subr.mxu0 0.0
    %1005 = vmatpush2.msra.mxu0 0.0
    %1006 = vmatprep.mubr.f32.mxu0 0.0
    %1007 = vmatmul.mubr.f32.gmra.mxu0 %v870
    %v1008 = vpop.f32.mrf.mxu0
    %v1009 = vadd.f32 0.0, %v1008
    %v1010 = vpop.f32.mrf.mxu0
    %v1011 = vadd.f32 0.0, %v1010
    %1012 = vdwg.mxu0
    %v1013 = vadd.f32 %v866, %v938
    %v1014 = vadd.f32 %v867, %v940
    %v1015 = vadd.f32 %v868, %v1009
    %v1016 = vadd.f32 %v869, %v1011
    %v1017 = vxor.u32 %v1013, 2147483648
    %v1018 = vmul.f32 %v1017, 1.442695
    %v1019 = vpow.pop %v1018
    %v1020 = vadd.f32 %v1019, 1.0
    %v1021 = vrcp.pop %v1020
    %v1022 = vmul.f32 1.0, %v1021
    %v1023 = vxor.u32 %v1014, 2147483648
    %v1024 = vmul.f32 %v1023, 1.442695
    %v1025 = vpow.pop %v1024
    %v1026 = vadd.f32 %v1025, 1.0
    %v1027 = vrcp.pop %v1026
    %v1028 = vmul.f32 1.0, %v1027
    %v1029 = vtanh.pop %v1015
    %v1030 = vxor.u32 %v1016, 2147483648
    %v1031 = vmul.f32 %v1030, 1.442695
    %v1032 = vpow.pop %v1031
    %v1033 = vadd.f32 %v1032, 1.0
    %v1034 = vrcp.pop %v1033
    %v1035 = vmul.f32 1.0, %v1034
    %v1036 = vld [vmem:[#allocation3] sm:$0xff]
    %v1037 = vmul.f32 %v1028, %v1036
    %v1038 = vmul.f32 %v1022, %v1029
    %v1039 = vadd.f32 %v1037, %v1038
    %v1040 = vtanh.pop %v1039
    %v1041 = vmul.f32 %v1035, %v1040
    %1042 = vst [vmem:[#allocation3] sm:$0xff] %v1039
    %1043 = vst [vmem:[#allocation2] sm:$0xff] %v1041
    %s1044 = smul.u32 3, 4
    %s1045 = smul.addr %s1044, 8
    %s1046 = scalar_lea.vmem [#allocation4], %s1045
    %v1047 = vld [vmem:[%s1046] sm:$0xff]
    %v1048 = vld [vmem:[%s1046 + $0x8] sm:$0xff]
    %v1049 = vld [vmem:[%s1046 + $0x10] sm:$0xff]
    %v1050 = vld [vmem:[%s1046 + $0x18] sm:$0xff]
    %v1051 = vld [vmem:[#allocation2] sm:$0xff]
    %1052 = vmatprep.subr.mxu0 %v498
    %1053 = vmatpush1.msra.mxu0 %v497
    %1054 = vmatprep.subr.mxu0 %v494
    %1055 = vmatpush1.msra.mxu0 %v493
    %1056 = vmatprep.subr.mxu0 %v490
    %1057 = vmatpush1.msra.mxu0 %v489
    %1058 = vmatprep.subr.mxu0 %v486
    %1059 = vmatpush1.msra.mxu0 %v485
    %1060 = vmatprep.subr.mxu0 %v482
    %1061 = vmatpush1.msra.mxu0 %v481
    %1062 = vmatprep.subr.mxu0 %v478
    %1063 = vmatpush1.msra.mxu0 %v477
    %1064 = vmatprep.subr.mxu0 %v474
    %1065 = vmatpush1.msra.mxu0 %v473
    %1066 = vmatprep.subr.mxu0 %v470
    %1067 = vmatpush1.msra.mxu0 %v469
    %1068 = vmatprep.subr.mxu0 %v466
    %1069 = vmatpush1.msra.mxu0 %v465
    %1070 = vmatprep.subr.mxu0 %v462
    %1071 = vmatpush1.msra.mxu0 %v461
    %1072 = vmatprep.subr.mxu0 %v458
    %1073 = vmatpush1.msra.mxu0 %v457
    %1074 = vmatprep.subr.mxu0 %v454
    %1075 = vmatpush1.msra.mxu0 %v453
    %1076 = vmatprep.subr.mxu0 %v450
    %1077 = vmatpush1.msra.mxu0 %v449
    %1078 = vmatprep.subr.mxu0 %v446
    %1079 = vmatpush1.msra.mxu0 %v445
    %1080 = vmatprep.subr.mxu0 %v442
    %1081 = vmatpush1.msra.mxu0 %v441
    %1082 = vmatprep.subr.mxu0 %v438
    %1083 = vmatpush1.msra.mxu0 %v437
    %1084 = vmatprep.subr.mxu0 0.0
    %1085 = vmatpush2.msra.mxu0 0.0
    %1086 = vmatprep.subr.mxu0 0.0
    %1087 = vmatpush2.msra.mxu0 0.0
    %1088 = vmatprep.subr.mxu0 0.0
    %1089 = vmatpush2.msra.mxu0 0.0
    %1090 = vmatprep.subr.mxu0 0.0
    %1091 = vmatpush2.msra.mxu0 0.0
    %1092 = vmatprep.subr.mxu0 0.0
    %1093 = vmatpush2.msra.mxu0 0.0
    %1094 = vmatprep.subr.mxu0 0.0
    %1095 = vmatpush2.msra.mxu0 0.0
    %1096 = vmatprep.subr.mxu0 0.0
    %1097 = vmatpush2.msra.mxu0 0.0
    %1098 = vmatprep.subr.mxu0 0.0
    %1099 = vmatpush2.msra.mxu0 0.0
    %1100 = vmatprep.subr.mxu0 0.0
    %1101 = vmatpush2.msra.mxu0 0.0
    %1102 = vmatprep.subr.mxu0 0.0
    %1103 = vmatpush2.msra.mxu0 0.0
    %1104 = vmatprep.subr.mxu0 0.0
    %1105 = vmatpush2.msra.mxu0 0.0
    %1106 = vmatprep.subr.mxu0 0.0
    %1107 = vmatpush2.msra.mxu0 0.0
    %1108 = vmatprep.subr.mxu0 0.0
    %1109 = vmatpush2.msra.mxu0 0.0
    %1110 = vmatprep.subr.mxu0 0.0
    %1111 = vmatpush2.msra.mxu0 0.0
    %1112 = vmatprep.subr.mxu0 0.0
    %1113 = vmatpush2.msra.mxu0 0.0
    %1114 = vmatprep.subr.mxu0 0.0
    %1115 = vmatpush2.msra.mxu0 0.0
    %1116 = vmatprep.mubr.f32.mxu0 0.0
    %1117 = vmatmul.mubr.f32.gmra.mxu0 %v1051
    %v1118 = vpop.f32.mrf.mxu0
    %v1119 = vadd.f32 0.0, %v1118
    %v1120 = vpop.f32.mrf.mxu0
    %v1121 = vadd.f32 0.0, %v1120
    %1122 = vdwg.mxu0
    %1123 = vmatprep.subr.mxu0 %v500
    %1124 = vmatpush1.msra.mxu0 %v499
    %1125 = vmatprep.subr.mxu0 %v496
    %1126 = vmatpush1.msra.mxu0 %v495
    %1127 = vmatprep.subr.mxu0 %v492
    %1128 = vmatpush1.msra.mxu0 %v491
    %1129 = vmatprep.subr.mxu0 %v488
    %1130 = vmatpush1.msra.mxu0 %v487
    %1131 = vmatprep.subr.mxu0 %v484
    %1132 = vmatpush1.msra.mxu0 %v483
    %1133 = vmatprep.subr.mxu0 %v480
    %1134 = vmatpush1.msra.mxu0 %v479
    %1135 = vmatprep.subr.mxu0 %v476
    %1136 = vmatpush1.msra.mxu0 %v475
    %1137 = vmatprep.subr.mxu0 %v472
    %1138 = vmatpush1.msra.mxu0 %v471
    %1139 = vmatprep.subr.mxu0 %v468
    %1140 = vmatpush1.msra.mxu0 %v467
    %1141 = vmatprep.subr.mxu0 %v464
    %1142 = vmatpush1.msra.mxu0 %v463
    %1143 = vmatprep.subr.mxu0 %v460
    %1144 = vmatpush1.msra.mxu0 %v459
    %1145 = vmatprep.subr.mxu0 %v456
    %1146 = vmatpush1.msra.mxu0 %v455
    %1147 = vmatprep.subr.mxu0 %v452
    %1148 = vmatpush1.msra.mxu0 %v451
    %1149 = vmatprep.subr.mxu0 %v448
    %1150 = vmatpush1.msra.mxu0 %v447
    %1151 = vmatprep.subr.mxu0 %v444
    %1152 = vmatpush1.msra.mxu0 %v443
    %1153 = vmatprep.subr.mxu0 %v440
    %1154 = vmatpush1.msra.mxu0 %v439
    %1155 = vmatprep.subr.mxu0 0.0
    %1156 = vmatpush2.msra.mxu0 0.0
    %1157 = vmatprep.subr.mxu0 0.0
    %1158 = vmatpush2.msra.mxu0 0.0
    %1159 = vmatprep.subr.mxu0 0.0
    %1160 = vmatpush2.msra.mxu0 0.0
    %1161 = vmatprep.subr.mxu0 0.0
    %1162 = vmatpush2.msra.mxu0 0.0
    %1163 = vmatprep.subr.mxu0 0.0
    %1164 = vmatpush2.msra.mxu0 0.0
    %1165 = vmatprep.subr.mxu0 0.0
    %1166 = vmatpush2.msra.mxu0 0.0
    %1167 = vmatprep.subr.mxu0 0.0
    %1168 = vmatpush2.msra.mxu0 0.0
    %1169 = vmatprep.subr.mxu0 0.0
    %1170 = vmatpush2.msra.mxu0 0.0
    %1171 = vmatprep.subr.mxu0 0.0
    %1172 = vmatpush2.msra.mxu0 0.0
    %1173 = vmatprep.subr.mxu0 0.0
    %1174 = vmatpush2.msra.mxu0 0.0
    %1175 = vmatprep.subr.mxu0 0.0
    %1176 = vmatpush2.msra.mxu0 0.0
    %1177 = vmatprep.subr.mxu0 0.0
    %1178 = vmatpush2.msra.mxu0 0.0
    %1179 = vmatprep.subr.mxu0 0.0
    %1180 = vmatpush2.msra.mxu0 0.0
    %1181 = vmatprep.subr.mxu0 0.0
    %1182 = vmatpush2.msra.mxu0 0.0
    %1183 = vmatprep.subr.mxu0 0.0
    %1184 = vmatpush2.msra.mxu0 0.0
    %1185 = vmatprep.subr.mxu0 0.0
    %1186 = vmatpush2.msra.mxu0 0.0
    %1187 = vmatprep.mubr.f32.mxu0 0.0
    %1188 = vmatmul.mubr.f32.gmra.mxu0 %v1051
    %v1189 = vpop.f32.mrf.mxu0
    %v1190 = vadd.f32 0.0, %v1189
    %v1191 = vpop.f32.mrf.mxu0
    %v1192 = vadd.f32 0.0, %v1191
    %1193 = vdwg.mxu0
    %v1194 = vadd.f32 %v1047, %v1119
    %v1195 = vadd.f32 %v1048, %v1121
    %v1196 = vadd.f32 %v1049, %v1190
    %v1197 = vadd.f32 %v1050, %v1192
    %v1198 = vxor.u32 %v1194, 2147483648
    %v1199 = vmul.f32 %v1198, 1.442695
    %v1200 = vpow.pop %v1199
    %v1201 = vadd.f32 %v1200, 1.0
    %v1202 = vrcp.pop %v1201
    %v1203 = vmul.f32 1.0, %v1202
    %v1204 = vxor.u32 %v1195, 2147483648
    %v1205 = vmul.f32 %v1204, 1.442695
    %v1206 = vpow.pop %v1205
    %v1207 = vadd.f32 %v1206, 1.0
    %v1208 = vrcp.pop %v1207
    %v1209 = vmul.f32 1.0, %v1208
    %v1210 = vtanh.pop %v1196
    %v1211 = vxor.u32 %v1197, 2147483648
    %v1212 = vmul.f32 %v1211, 1.442695
    %v1213 = vpow.pop %v1212
    %v1214 = vadd.f32 %v1213, 1.0
    %v1215 = vrcp.pop %v1214
    %v1216 = vmul.f32 1.0, %v1215
    %v1217 = vld [vmem:[#allocation3] sm:$0xff]
    %v1218 = vmul.f32 %v1209, %v1217
    %v1219 = vmul.f32 %v1203, %v1210
    %v1220 = vadd.f32 %v1218, %v1219
    %v1221 = vtanh.pop %v1220
    %v1222 = vmul.f32 %v1216, %v1221
    %1223 = vst [vmem:[#allocation3] sm:$0xff] %v1220
    %1224 = vst [vmem:[#allocation2] sm:$0xff] %v1222
    %s1225 = smul.u32 4, 4
    %s1226 = smul.addr %s1225, 8
    %s1227 = scalar_lea.vmem [#allocation4], %s1226
    %v1228 = vld [vmem:[%s1227] sm:$0xff]
    %v1229 = vld [vmem:[%s1227 + $0x8] sm:$0xff]
    %v1230 = vld [vmem:[%s1227 + $0x10] sm:$0xff]
    %v1231 = vld [vmem:[%s1227 + $0x18] sm:$0xff]
    %v1232 = vld [vmem:[#allocation2] sm:$0xff]
    %1233 = vmatprep.subr.mxu0 %v498
    %1234 = vmatpush1.msra.mxu0 %v497
    %1235 = vmatprep.subr.mxu0 %v494
    %1236 = vmatpush1.msra.mxu0 %v493
    %1237 = vmatprep.subr.mxu0 %v490
    %1238 = vmatpush1.msra.mxu0 %v489
    %1239 = vmatprep.subr.mxu0 %v486
    %1240 = vmatpush1.msra.mxu0 %v485
    %1241 = vmatprep.subr.mxu0 %v482
    %1242 = vmatpush1.msra.mxu0 %v481
    %1243 = vmatprep.subr.mxu0 %v478
    %1244 = vmatpush1.msra.mxu0 %v477
    %1245 = vmatprep.subr.mxu0 %v474
    %1246 = vmatpush1.msra.mxu0 %v473
    %1247 = vmatprep.subr.mxu0 %v470
    %1248 = vmatpush1.msra.mxu0 %v469
    %1249 = vmatprep.subr.mxu0 %v466
    %1250 = vmatpush1.msra.mxu0 %v465
    %1251 = vmatprep.subr.mxu0 %v462
    %1252 = vmatpush1.msra.mxu0 %v461
    %1253 = vmatprep.subr.mxu0 %v458
    %1254 = vmatpush1.msra.mxu0 %v457
    %1255 = vmatprep.subr.mxu0 %v454
    %1256 = vmatpush1.msra.mxu0 %v453
    %1257 = vmatprep.subr.mxu0 %v450
    %1258 = vmatpush1.msra.mxu0 %v449
    %1259 = vmatprep.subr.mxu0 %v446
    %1260 = vmatpush1.msra.mxu0 %v445
    %1261 = vmatprep.subr.mxu0 %v442
    %1262 = vmatpush1.msra.mxu0 %v441
    %1263 = vmatprep.subr.mxu0 %v438
    %1264 = vmatpush1.msra.mxu0 %v437
    %1265 = vmatprep.subr.mxu0 0.0
    %1266 = vmatpush2.msra.mxu0 0.0
    %1267 = vmatprep.subr.mxu0 0.0
    %1268 = vmatpush2.msra.mxu0 0.0
    %1269 = vmatprep.subr.mxu0 0.0
    %1270 = vmatpush2.msra.mxu0 0.0
    %1271 = vmatprep.subr.mxu0 0.0
    %1272 = vmatpush2.msra.mxu0 0.0
    %1273 = vmatprep.subr.mxu0 0.0
    %1274 = vmatpush2.msra.mxu0 0.0
    %1275 = vmatprep.subr.mxu0 0.0
    %1276 = vmatpush2.msra.mxu0 0.0
    %1277 = vmatprep.subr.mxu0 0.0
    %1278 = vmatpush2.msra.mxu0 0.0
    %1279 = vmatprep.subr.mxu0 0.0
    %1280 = vmatpush2.msra.mxu0 0.0
    %1281 = vmatprep.subr.mxu0 0.0
    %1282 = vmatpush2.msra.mxu0 0.0
    %1283 = vmatprep.subr.mxu0 0.0
    %1284 = vmatpush2.msra.mxu0 0.0
    %1285 = vmatprep.subr.mxu0 0.0
    %1286 = vmatpush2.msra.mxu0 0.0
    %1287 = vmatprep.subr.mxu0 0.0
    %1288 = vmatpush2.msra.mxu0 0.0
    %1289 = vmatprep.subr.mxu0 0.0
    %1290 = vmatpush2.msra.mxu0 0.0
    %1291 = vmatprep.subr.mxu0 0.0
    %1292 = vmatpush2.msra.mxu0 0.0
    %1293 = vmatprep.subr.mxu0 0.0
    %1294 = vmatpush2.msra.mxu0 0.0
    %1295 = vmatprep.subr.mxu0 0.0
    %1296 = vmatpush2.msra.mxu0 0.0
    %1297 = vmatprep.mubr.f32.mxu0 0.0
    %1298 = vmatmul.mubr.f32.gmra.mxu0 %v1232
    %v1299 = vpop.f32.mrf.mxu0
    %v1300 = vadd.f32 0.0, %v1299
    %v1301 = vpop.f32.mrf.mxu0
    %v1302 = vadd.f32 0.0, %v1301
    %1303 = vdwg.mxu0
    %1304 = vmatprep.subr.mxu0 %v500
    %1305 = vmatpush1.msra.mxu0 %v499
    %1306 = vmatprep.subr.mxu0 %v496
    %1307 = vmatpush1.msra.mxu0 %v495
    %1308 = vmatprep.subr.mxu0 %v492
    %1309 = vmatpush1.msra.mxu0 %v491
    %1310 = vmatprep.subr.mxu0 %v488
    %1311 = vmatpush1.msra.mxu0 %v487
    %1312 = vmatprep.subr.mxu0 %v484
    %1313 = vmatpush1.msra.mxu0 %v483
    %1314 = vmatprep.subr.mxu0 %v480
    %1315 = vmatpush1.msra.mxu0 %v479
    %1316 = vmatprep.subr.mxu0 %v476
    %1317 = vmatpush1.msra.mxu0 %v475
    %1318 = vmatprep.subr.mxu0 %v472
    %1319 = vmatpush1.msra.mxu0 %v471
    %1320 = vmatprep.subr.mxu0 %v468
    %1321 = vmatpush1.msra.mxu0 %v467
    %1322 = vmatprep.subr.mxu0 %v464
    %1323 = vmatpush1.msra.mxu0 %v463
    %1324 = vmatprep.subr.mxu0 %v460
    %1325 = vmatpush1.msra.mxu0 %v459
    %1326 = vmatprep.subr.mxu0 %v456
    %1327 = vmatpush1.msra.mxu0 %v455
    %1328 = vmatprep.subr.mxu0 %v452
    %1329 = vmatpush1.msra.mxu0 %v451
    %1330 = vmatprep.subr.mxu0 %v448
    %1331 = vmatpush1.msra.mxu0 %v447
    %1332 = vmatprep.subr.mxu0 %v444
    %1333 = vmatpush1.msra.mxu0 %v443
    %1334 = vmatprep.subr.mxu0 %v440
    %1335 = vmatpush1.msra.mxu0 %v439
    %1336 = vmatprep.subr.mxu0 0.0
    %1337 = vmatpush2.msra.mxu0 0.0
    %1338 = vmatprep.subr.mxu0 0.0
    %1339 = vmatpush2.msra.mxu0 0.0
    %1340 = vmatprep.subr.mxu0 0.0
    %1341 = vmatpush2.msra.mxu0 0.0
    %1342 = vmatprep.subr.mxu0 0.0
    %1343 = vmatpush2.msra.mxu0 0.0
    %1344 = vmatprep.subr.mxu0 0.0
    %1345 = vmatpush2.msra.mxu0 0.0
    %1346 = vmatprep.subr.mxu0 0.0
    %1347 = vmatpush2.msra.mxu0 0.0
    %1348 = vmatprep.subr.mxu0 0.0
    %1349 = vmatpush2.msra.mxu0 0.0
    %1350 = vmatprep.subr.mxu0 0.0
    %1351 = vmatpush2.msra.mxu0 0.0
    %1352 = vmatprep.subr.mxu0 0.0
    %1353 = vmatpush2.msra.mxu0 0.0
    %1354 = vmatprep.subr.mxu0 0.0
    %1355 = vmatpush2.msra.mxu0 0.0
    %1356 = vmatprep.subr.mxu0 0.0
    %1357 = vmatpush2.msra.mxu0 0.0
    %1358 = vmatprep.subr.mxu0 0.0
    %1359 = vmatpush2.msra.mxu0 0.0
    %1360 = vmatprep.subr.mxu0 0.0
    %1361 = vmatpush2.msra.mxu0 0.0
    %1362 = vmatprep.subr.mxu0 0.0
    %1363 = vmatpush2.msra.mxu0 0.0
    %1364 = vmatprep.subr.mxu0 0.0
    %1365 = vmatpush2.msra.mxu0 0.0
    %1366 = vmatprep.subr.mxu0 0.0
    %1367 = vmatpush2.msra.mxu0 0.0
    %1368 = vmatprep.mubr.f32.mxu0 0.0
    %1369 = vmatmul.mubr.f32.gmra.mxu0 %v1232
    %v1370 = vpop.f32.mrf.mxu0
    %v1371 = vadd.f32 0.0, %v1370
    %v1372 = vpop.f32.mrf.mxu0
    %v1373 = vadd.f32 0.0, %v1372
    %1374 = vdwg.mxu0
    %v1375 = vadd.f32 %v1228, %v1300
    %v1376 = vadd.f32 %v1229, %v1302
    %v1377 = vadd.f32 %v1230, %v1371
    %v1378 = vadd.f32 %v1231, %v1373
    %v1379 = vxor.u32 %v1375, 2147483648
    %v1380 = vmul.f32 %v1379, 1.442695
    %v1381 = vpow.pop %v1380
    %v1382 = vadd.f32 %v1381, 1.0
    %v1383 = vrcp.pop %v1382
    %v1384 = vmul.f32 1.0, %v1383
    %v1385 = vxor.u32 %v1376, 2147483648
    %v1386 = vmul.f32 %v1385, 1.442695
    %v1387 = vpow.pop %v1386
    %v1388 = vadd.f32 %v1387, 1.0
    %v1389 = vrcp.pop %v1388
    %v1390 = vmul.f32 1.0, %v1389
    %v1391 = vtanh.pop %v1377
    %v1392 = vxor.u32 %v1378, 2147483648
    %v1393 = vmul.f32 %v1392, 1.442695
    %v1394 = vpow.pop %v1393
    %v1395 = vadd.f32 %v1394, 1.0
    %v1396 = vrcp.pop %v1395
    %v1397 = vmul.f32 1.0, %v1396
    %v1398 = vld [vmem:[#allocation3] sm:$0xff]
    %v1399 = vmul.f32 %v1390, %v1398
    %v1400 = vmul.f32 %v1384, %v1391
    %v1401 = vadd.f32 %v1399, %v1400
    %v1402 = vtanh.pop %v1401
    %v1403 = vmul.f32 %v1397, %v1402
    %1404 = vst [vmem:[#allocation3] sm:$0xff] %v1401
    %1405 = vst [vmem:[#allocation2] sm:$0xff] %v1403
    %s1406 = smul.u32 5, 4
    %s1407 = smul.addr %s1406, 8
    %s1408 = scalar_lea.vmem [#allocation4], %s1407
    %v1409 = vld [vmem:[%s1408] sm:$0xff]
    %v1410 = vld [vmem:[%s1408 + $0x8] sm:$0xff]
    %v1411 = vld [vmem:[%s1408 + $0x10] sm:$0xff]
    %v1412 = vld [vmem:[%s1408 + $0x18] sm:$0xff]
    %v1413 = vld [vmem:[#allocation2] sm:$0xff]
    %1414 = vmatprep.subr.mxu0 %v498
    %1415 = vmatpush1.msra.mxu0 %v497
    %1416 = vmatprep.subr.mxu0 %v494
    %1417 = vmatpush1.msra.mxu0 %v493
    %1418 = vmatprep.subr.mxu0 %v490
    %1419 = vmatpush1.msra.mxu0 %v489
    %1420 = vmatprep.subr.mxu0 %v486
    %1421 = vmatpush1.msra.mxu0 %v485
    %1422 = vmatprep.subr.mxu0 %v482
    %1423 = vmatpush1.msra.mxu0 %v481
    %1424 = vmatprep.subr.mxu0 %v478
    %1425 = vmatpush1.msra.mxu0 %v477
    %1426 = vmatprep.subr.mxu0 %v474
    %1427 = vmatpush1.msra.mxu0 %v473
    %1428 = vmatprep.subr.mxu0 %v470
    %1429 = vmatpush1.msra.mxu0 %v469
    %1430 = vmatprep.subr.mxu0 %v466
    %1431 = vmatpush1.msra.mxu0 %v465
    %1432 = vmatprep.subr.mxu0 %v462
    %1433 = vmatpush1.msra.mxu0 %v461
    %1434 = vmatprep.subr.mxu0 %v458
    %1435 = vmatpush1.msra.mxu0 %v457
    %1436 = vmatprep.subr.mxu0 %v454
    %1437 = vmatpush1.msra.mxu0 %v453
    %1438 = vmatprep.subr.mxu0 %v450
    %1439 = vmatpush1.msra.mxu0 %v449
    %1440 = vmatprep.subr.mxu0 %v446
    %1441 = vmatpush1.msra.mxu0 %v445
    %1442 = vmatprep.subr.mxu0 %v442
    %1443 = vmatpush1.msra.mxu0 %v441
    %1444 = vmatprep.subr.mxu0 %v438
    %1445 = vmatpush1.msra.mxu0 %v437
    %1446 = vmatprep.subr.mxu0 0.0
    %1447 = vmatpush2.msra.mxu0 0.0
    %1448 = vmatprep.subr.mxu0 0.0
    %1449 = vmatpush2.msra.mxu0 0.0
    %1450 = vmatprep.subr.mxu0 0.0
    %1451 = vmatpush2.msra.mxu0 0.0
    %1452 = vmatprep.subr.mxu0 0.0
    %1453 = vmatpush2.msra.mxu0 0.0
    %1454 = vmatprep.subr.mxu0 0.0
    %1455 = vmatpush2.msra.mxu0 0.0
    %1456 = vmatprep.subr.mxu0 0.0
    %1457 = vmatpush2.msra.mxu0 0.0
    %1458 = vmatprep.subr.mxu0 0.0
    %1459 = vmatpush2.msra.mxu0 0.0
    %1460 = vmatprep.subr.mxu0 0.0
    %1461 = vmatpush2.msra.mxu0 0.0
    %1462 = vmatprep.subr.mxu0 0.0
    %1463 = vmatpush2.msra.mxu0 0.0
    %1464 = vmatprep.subr.mxu0 0.0
    %1465 = vmatpush2.msra.mxu0 0.0
    %1466 = vmatprep.subr.mxu0 0.0
    %1467 = vmatpush2.msra.mxu0 0.0
    %1468 = vmatprep.subr.mxu0 0.0
    %1469 = vmatpush2.msra.mxu0 0.0
    %1470 = vmatprep.subr.mxu0 0.0
    %1471 = vmatpush2.msra.mxu0 0.0
    %1472 = vmatprep.subr.mxu0 0.0
    %1473 = vmatpush2.msra.mxu0 0.0
    %1474 = vmatprep.subr.mxu0 0.0
    %1475 = vmatpush2.msra.mxu0 0.0
    %1476 = vmatprep.subr.mxu0 0.0
    %1477 = vmatpush2.msra.mxu0 0.0
    %1478 = vmatprep.mubr.f32.mxu0 0.0
    %1479 = vmatmul.mubr.f32.gmra.mxu0 %v1413
    %v1480 = vpop.f32.mrf.mxu0
    %v1481 = vadd.f32 0.0, %v1480
    %v1482 = vpop.f32.mrf.mxu0
    %v1483 = vadd.f32 0.0, %v1482
    %1484 = vdwg.mxu0
    %1485 = vmatprep.subr.mxu0 %v500
    %1486 = vmatpush1.msra.mxu0 %v499
    %1487 = vmatprep.subr.mxu0 %v496
    %1488 = vmatpush1.msra.mxu0 %v495
    %1489 = vmatprep.subr.mxu0 %v492
    %1490 = vmatpush1.msra.mxu0 %v491
    %1491 = vmatprep.subr.mxu0 %v488
    %1492 = vmatpush1.msra.mxu0 %v487
    %1493 = vmatprep.subr.mxu0 %v484
    %1494 = vmatpush1.msra.mxu0 %v483
    %1495 = vmatprep.subr.mxu0 %v480
    %1496 = vmatpush1.msra.mxu0 %v479
    %1497 = vmatprep.subr.mxu0 %v476
    %1498 = vmatpush1.msra.mxu0 %v475
    %1499 = vmatprep.subr.mxu0 %v472
    %1500 = vmatpush1.msra.mxu0 %v471
    %1501 = vmatprep.subr.mxu0 %v468
    %1502 = vmatpush1.msra.mxu0 %v467
    %1503 = vmatprep.subr.mxu0 %v464
    %1504 = vmatpush1.msra.mxu0 %v463
    %1505 = vmatprep.subr.mxu0 %v460
    %1506 = vmatpush1.msra.mxu0 %v459
    %1507 = vmatprep.subr.mxu0 %v456
    %1508 = vmatpush1.msra.mxu0 %v455
    %1509 = vmatprep.subr.mxu0 %v452
    %1510 = vmatpush1.msra.mxu0 %v451
    %1511 = vmatprep.subr.mxu0 %v448
    %1512 = vmatpush1.msra.mxu0 %v447
    %1513 = vmatprep.subr.mxu0 %v444
    %1514 = vmatpush1.msra.mxu0 %v443
    %1515 = vmatprep.subr.mxu0 %v440
    %1516 = vmatpush1.msra.mxu0 %v439
    %1517 = vmatprep.subr.mxu0 0.0
    %1518 = vmatpush2.msra.mxu0 0.0
    %1519 = vmatprep.subr.mxu0 0.0
    %1520 = vmatpush2.msra.mxu0 0.0
    %1521 = vmatprep.subr.mxu0 0.0
    %1522 = vmatpush2.msra.mxu0 0.0
    %1523 = vmatprep.subr.mxu0 0.0
    %1524 = vmatpush2.msra.mxu0 0.0
    %1525 = vmatprep.subr.mxu0 0.0
    %1526 = vmatpush2.msra.mxu0 0.0
    %1527 = vmatprep.subr.mxu0 0.0
    %1528 = vmatpush2.msra.mxu0 0.0
    %1529 = vmatprep.subr.mxu0 0.0
    %1530 = vmatpush2.msra.mxu0 0.0
    %1531 = vmatprep.subr.mxu0 0.0
    %1532 = vmatpush2.msra.mxu0 0.0
    %1533 = vmatprep.subr.mxu0 0.0
    %1534 = vmatpush2.msra.mxu0 0.0
    %1535 = vmatprep.subr.mxu0 0.0
    %1536 = vmatpush2.msra.mxu0 0.0
    %1537 = vmatprep.subr.mxu0 0.0
    %1538 = vmatpush2.msra.mxu0 0.0
    %1539 = vmatprep.subr.mxu0 0.0
    %1540 = vmatpush2.msra.mxu0 0.0
    %1541 = vmatprep.subr.mxu0 0.0
    %1542 = vmatpush2.msra.mxu0 0.0
    %1543 = vmatprep.subr.mxu0 0.0
    %1544 = vmatpush2.msra.mxu0 0.0
    %1545 = vmatprep.subr.mxu0 0.0
    %1546 = vmatpush2.msra.mxu0 0.0
    %1547 = vmatprep.subr.mxu0 0.0
    %1548 = vmatpush2.msra.mxu0 0.0
    %1549 = vmatprep.mubr.f32.mxu0 0.0
    %1550 = vmatmul.mubr.f32.gmra.mxu0 %v1413
    %v1551 = vpop.f32.mrf.mxu0
    %v1552 = vadd.f32 0.0, %v1551
    %v1553 = vpop.f32.mrf.mxu0
    %v1554 = vadd.f32 0.0, %v1553
    %1555 = vdwg.mxu0
    %v1556 = vadd.f32 %v1409, %v1481
    %v1557 = vadd.f32 %v1410, %v1483
    %v1558 = vadd.f32 %v1411, %v1552
    %v1559 = vadd.f32 %v1412, %v1554
    %v1560 = vxor.u32 %v1556, 2147483648
    %v1561 = vmul.f32 %v1560, 1.442695
    %v1562 = vpow.pop %v1561
    %v1563 = vadd.f32 %v1562, 1.0
    %v1564 = vrcp.pop %v1563
    %v1565 = vmul.f32 1.0, %v1564
    %v1566 = vxor.u32 %v1557, 2147483648
    %v1567 = vmul.f32 %v1566, 1.442695
    %v1568 = vpow.pop %v1567
    %v1569 = vadd.f32 %v1568, 1.0
    %v1570 = vrcp.pop %v1569
    %v1571 = vmul.f32 1.0, %v1570
    %v1572 = vtanh.pop %v1558
    %v1573 = vxor.u32 %v1559, 2147483648
    %v1574 = vmul.f32 %v1573, 1.442695
    %v1575 = vpow.pop %v1574
    %v1576 = vadd.f32 %v1575, 1.0
    %v1577 = vrcp.pop %v1576
    %v1578 = vmul.f32 1.0, %v1577
    %v1579 = vld [vmem:[#allocation3] sm:$0xff]
    %v1580 = vmul.f32 %v1571, %v1579
    %v1581 = vmul.f32 %v1565, %v1572
    %v1582 = vadd.f32 %v1580, %v1581
    %v1583 = vtanh.pop %v1582
    %v1584 = vmul.f32 %v1578, %v1583
    %1585 = vst [vmem:[#allocation3] sm:$0xff] %v1582
    %1586 = vst [vmem:[#allocation2] sm:$0xff] %v1584
    %s1587 = smul.u32 6, 4
    %s1588 = smul.addr %s1587, 8
    %s1589 = scalar_lea.vmem [#allocation4], %s1588
    %v1590 = vld [vmem:[%s1589] sm:$0xff]
    %v1591 = vld [vmem:[%s1589 + $0x8] sm:$0xff]
    %v1592 = vld [vmem:[%s1589 + $0x10] sm:$0xff]
    %v1593 = vld [vmem:[%s1589 + $0x18] sm:$0xff]
    %v1594 = vld [vmem:[#allocation2] sm:$0xff]
    %1595 = vmatprep.subr.mxu0 %v498
    %1596 = vmatpush1.msra.mxu0 %v497
    %1597 = vmatprep.subr.mxu0 %v494
    %1598 = vmatpush1.msra.mxu0 %v493
    %1599 = vmatprep.subr.mxu0 %v490
    %1600 = vmatpush1.msra.mxu0 %v489
    %1601 = vmatprep.subr.mxu0 %v486
    %1602 = vmatpush1.msra.mxu0 %v485
    %1603 = vmatprep.subr.mxu0 %v482
    %1604 = vmatpush1.msra.mxu0 %v481
    %1605 = vmatprep.subr.mxu0 %v478
    %1606 = vmatpush1.msra.mxu0 %v477
    %1607 = vmatprep.subr.mxu0 %v474
    %1608 = vmatpush1.msra.mxu0 %v473
    %1609 = vmatprep.subr.mxu0 %v470
    %1610 = vmatpush1.msra.mxu0 %v469
    %1611 = vmatprep.subr.mxu0 %v466
    %1612 = vmatpush1.msra.mxu0 %v465
    %1613 = vmatprep.subr.mxu0 %v462
    %1614 = vmatpush1.msra.mxu0 %v461
    %1615 = vmatprep.subr.mxu0 %v458
    %1616 = vmatpush1.msra.mxu0 %v457
    %1617 = vmatprep.subr.mxu0 %v454
    %1618 = vmatpush1.msra.mxu0 %v453
    %1619 = vmatprep.subr.mxu0 %v450
    %1620 = vmatpush1.msra.mxu0 %v449
    %1621 = vmatprep.subr.mxu0 %v446
    %1622 = vmatpush1.msra.mxu0 %v445
    %1623 = vmatprep.subr.mxu0 %v442
    %1624 = vmatpush1.msra.mxu0 %v441
    %1625 = vmatprep.subr.mxu0 %v438
    %1626 = vmatpush1.msra.mxu0 %v437
    %1627 = vmatprep.subr.mxu0 0.0
    %1628 = vmatpush2.msra.mxu0 0.0
    %1629 = vmatprep.subr.mxu0 0.0
    %1630 = vmatpush2.msra.mxu0 0.0
    %1631 = vmatprep.subr.mxu0 0.0
    %1632 = vmatpush2.msra.mxu0 0.0
    %1633 = vmatprep.subr.mxu0 0.0
    %1634 = vmatpush2.msra.mxu0 0.0
    %1635 = vmatprep.subr.mxu0 0.0
    %1636 = vmatpush2.msra.mxu0 0.0
    %1637 = vmatprep.subr.mxu0 0.0
    %1638 = vmatpush2.msra.mxu0 0.0
    %1639 = vmatprep.subr.mxu0 0.0
    %1640 = vmatpush2.msra.mxu0 0.0
    %1641 = vmatprep.subr.mxu0 0.0
    %1642 = vmatpush2.msra.mxu0 0.0
    %1643 = vmatprep.subr.mxu0 0.0
    %1644 = vmatpush2.msra.mxu0 0.0
    %1645 = vmatprep.subr.mxu0 0.0
    %1646 = vmatpush2.msra.mxu0 0.0
    %1647 = vmatprep.subr.mxu0 0.0
    %1648 = vmatpush2.msra.mxu0 0.0
    %1649 = vmatprep.subr.mxu0 0.0
    %1650 = vmatpush2.msra.mxu0 0.0
    %1651 = vmatprep.subr.mxu0 0.0
    %1652 = vmatpush2.msra.mxu0 0.0
    %1653 = vmatprep.subr.mxu0 0.0
    %1654 = vmatpush2.msra.mxu0 0.0
    %1655 = vmatprep.subr.mxu0 0.0
    %1656 = vmatpush2.msra.mxu0 0.0
    %1657 = vmatprep.subr.mxu0 0.0
    %1658 = vmatpush2.msra.mxu0 0.0
    %1659 = vmatprep.mubr.f32.mxu0 0.0
    %1660 = vmatmul.mubr.f32.gmra.mxu0 %v1594
    %v1661 = vpop.f32.mrf.mxu0
    %v1662 = vadd.f32 0.0, %v1661
    %v1663 = vpop.f32.mrf.mxu0
    %v1664 = vadd.f32 0.0, %v1663
    %1665 = vdwg.mxu0
    %1666 = vmatprep.subr.mxu0 %v500
    %1667 = vmatpush1.msra.mxu0 %v499
    %1668 = vmatprep.subr.mxu0 %v496
    %1669 = vmatpush1.msra.mxu0 %v495
    %1670 = vmatprep.subr.mxu0 %v492
    %1671 = vmatpush1.msra.mxu0 %v491
    %1672 = vmatprep.subr.mxu0 %v488
    %1673 = vmatpush1.msra.mxu0 %v487
    %1674 = vmatprep.subr.mxu0 %v484
    %1675 = vmatpush1.msra.mxu0 %v483
    %1676 = vmatprep.subr.mxu0 %v480
    %1677 = vmatpush1.msra.mxu0 %v479
    %1678 = vmatprep.subr.mxu0 %v476
    %1679 = vmatpush1.msra.mxu0 %v475
    %1680 = vmatprep.subr.mxu0 %v472
    %1681 = vmatpush1.msra.mxu0 %v471
    %1682 = vmatprep.subr.mxu0 %v468
    %1683 = vmatpush1.msra.mxu0 %v467
    %1684 = vmatprep.subr.mxu0 %v464
    %1685 = vmatpush1.msra.mxu0 %v463
    %1686 = vmatprep.subr.mxu0 %v460
    %1687 = vmatpush1.msra.mxu0 %v459
    %1688 = vmatprep.subr.mxu0 %v456
    %1689 = vmatpush1.msra.mxu0 %v455
    %1690 = vmatprep.subr.mxu0 %v452
    %1691 = vmatpush1.msra.mxu0 %v451
    %1692 = vmatprep.subr.mxu0 %v448
    %1693 = vmatpush1.msra.mxu0 %v447
    %1694 = vmatprep.subr.mxu0 %v444
    %1695 = vmatpush1.msra.mxu0 %v443
    %1696 = vmatprep.subr.mxu0 %v440
    %1697 = vmatpush1.msra.mxu0 %v439
    %1698 = vmatprep.subr.mxu0 0.0
    %1699 = vmatpush2.msra.mxu0 0.0
    %1700 = vmatprep.subr.mxu0 0.0
    %1701 = vmatpush2.msra.mxu0 0.0
    %1702 = vmatprep.subr.mxu0 0.0
    %1703 = vmatpush2.msra.mxu0 0.0
    %1704 = vmatprep.subr.mxu0 0.0
    %1705 = vmatpush2.msra.mxu0 0.0
    %1706 = vmatprep.subr.mxu0 0.0
    %1707 = vmatpush2.msra.mxu0 0.0
    %1708 = vmatprep.subr.mxu0 0.0
    %1709 = vmatpush2.msra.mxu0 0.0
    %1710 = vmatprep.subr.mxu0 0.0
    %1711 = vmatpush2.msra.mxu0 0.0
    %1712 = vmatprep.subr.mxu0 0.0
    %1713 = vmatpush2.msra.mxu0 0.0
    %1714 = vmatprep.subr.mxu0 0.0
    %1715 = vmatpush2.msra.mxu0 0.0
    %1716 = vmatprep.subr.mxu0 0.0
    %1717 = vmatpush2.msra.mxu0 0.0
    %1718 = vmatprep.subr.mxu0 0.0
    %1719 = vmatpush2.msra.mxu0 0.0
    %1720 = vmatprep.subr.mxu0 0.0
    %1721 = vmatpush2.msra.mxu0 0.0
    %1722 = vmatprep.subr.mxu0 0.0
    %1723 = vmatpush2.msra.mxu0 0.0
    %1724 = vmatprep.subr.mxu0 0.0
    %1725 = vmatpush2.msra.mxu0 0.0
    %1726 = vmatprep.subr.mxu0 0.0
    %1727 = vmatpush2.msra.mxu0 0.0
    %1728 = vmatprep.subr.mxu0 0.0
    %1729 = vmatpush2.msra.mxu0 0.0
    %1730 = vmatprep.mubr.f32.mxu0 0.0
    %1731 = vmatmul.mubr.f32.gmra.mxu0 %v1594
    %v1732 = vpop.f32.mrf.mxu0
    %v1733 = vadd.f32 0.0, %v1732
    %v1734 = vpop.f32.mrf.mxu0
    %v1735 = vadd.f32 0.0, %v1734
    %1736 = vdwg.mxu0
    %v1737 = vadd.f32 %v1590, %v1662
    %v1738 = vadd.f32 %v1591, %v1664
    %v1739 = vadd.f32 %v1592, %v1733
    %v1740 = vadd.f32 %v1593, %v1735
    %v1741 = vxor.u32 %v1737, 2147483648
    %v1742 = vmul.f32 %v1741, 1.442695
    %v1743 = vpow.pop %v1742
    %v1744 = vadd.f32 %v1743, 1.0
    %v1745 = vrcp.pop %v1744
    %v1746 = vmul.f32 1.0, %v1745
    %v1747 = vxor.u32 %v1738, 2147483648
    %v1748 = vmul.f32 %v1747, 1.442695
    %v1749 = vpow.pop %v1748
    %v1750 = vadd.f32 %v1749, 1.0
    %v1751 = vrcp.pop %v1750
    %v1752 = vmul.f32 1.0, %v1751
    %v1753 = vtanh.pop %v1739
    %v1754 = vxor.u32 %v1740, 2147483648
    %v1755 = vmul.f32 %v1754, 1.442695
    %v1756 = vpow.pop %v1755
    %v1757 = vadd.f32 %v1756, 1.0
    %v1758 = vrcp.pop %v1757
    %v1759 = vmul.f32 1.0, %v1758
    %v1760 = vld [vmem:[#allocation3] sm:$0xff]
    %v1761 = vmul.f32 %v1752, %v1760
    %v1762 = vmul.f32 %v1746, %v1753
    %v1763 = vadd.f32 %v1761, %v1762
    %v1764 = vtanh.pop %v1763
    %v1765 = vmul.f32 %v1759, %v1764
    %1766 = vst [vmem:[#allocation3] sm:$0xff] %v1763
    %1767 = vst [vmem:[#allocation2] sm:$0xff] %v1765
    %s1768 = smul.u32 7, 4
    %s1769 = smul.addr %s1768, 8
    %s1770 = scalar_lea.vmem [#allocation4], %s1769
    %v1771 = vld [vmem:[%s1770] sm:$0xff]
    %v1772 = vld [vmem:[%s1770 + $0x8] sm:$0xff]
    %v1773 = vld [vmem:[%s1770 + $0x10] sm:$0xff]
    %v1774 = vld [vmem:[%s1770 + $0x18] sm:$0xff]
    %v1775 = vld [vmem:[#allocation2] sm:$0xff]
    %1776 = vmatprep.subr.mxu0 %v498
    %1777 = vmatpush1.msra.mxu0 %v497
    %1778 = vmatprep.subr.mxu0 %v494
    %1779 = vmatpush1.msra.mxu0 %v493
    %1780 = vmatprep.subr.mxu0 %v490
    %1781 = vmatpush1.msra.mxu0 %v489
    %1782 = vmatprep.subr.mxu0 %v486
    %1783 = vmatpush1.msra.mxu0 %v485
    %1784 = vmatprep.subr.mxu0 %v482
    %1785 = vmatpush1.msra.mxu0 %v481
    %1786 = vmatprep.subr.mxu0 %v478
    %1787 = vmatpush1.msra.mxu0 %v477
    %1788 = vmatprep.subr.mxu0 %v474
    %1789 = vmatpush1.msra.mxu0 %v473
    %1790 = vmatprep.subr.mxu0 %v470
    %1791 = vmatpush1.msra.mxu0 %v469
    %1792 = vmatprep.subr.mxu0 %v466
    %1793 = vmatpush1.msra.mxu0 %v465
    %1794 = vmatprep.subr.mxu0 %v462
    %1795 = vmatpush1.msra.mxu0 %v461
    %1796 = vmatprep.subr.mxu0 %v458
    %1797 = vmatpush1.msra.mxu0 %v457
    %1798 = vmatprep.subr.mxu0 %v454
    %1799 = vmatpush1.msra.mxu0 %v453
    %1800 = vmatprep.subr.mxu0 %v450
    %1801 = vmatpush1.msra.mxu0 %v449
    %1802 = vmatprep.subr.mxu0 %v446
    %1803 = vmatpush1.msra.mxu0 %v445
    %1804 = vmatprep.subr.mxu0 %v442
    %1805 = vmatpush1.msra.mxu0 %v441
    %1806 = vmatprep.subr.mxu0 %v438
    %1807 = vmatpush1.msra.mxu0 %v437
    %1808 = vmatprep.subr.mxu0 0.0
    %1809 = vmatpush2.msra.mxu0 0.0
    %1810 = vmatprep.subr.mxu0 0.0
    %1811 = vmatpush2.msra.mxu0 0.0
    %1812 = vmatprep.subr.mxu0 0.0
    %1813 = vmatpush2.msra.mxu0 0.0
    %1814 = vmatprep.subr.mxu0 0.0
    %1815 = vmatpush2.msra.mxu0 0.0
    %1816 = vmatprep.subr.mxu0 0.0
    %1817 = vmatpush2.msra.mxu0 0.0
    %1818 = vmatprep.subr.mxu0 0.0
    %1819 = vmatpush2.msra.mxu0 0.0
    %1820 = vmatprep.subr.mxu0 0.0
    %1821 = vmatpush2.msra.mxu0 0.0
    %1822 = vmatprep.subr.mxu0 0.0
    %1823 = vmatpush2.msra.mxu0 0.0
    %1824 = vmatprep.subr.mxu0 0.0
    %1825 = vmatpush2.msra.mxu0 0.0
    %1826 = vmatprep.subr.mxu0 0.0
    %1827 = vmatpush2.msra.mxu0 0.0
    %1828 = vmatprep.subr.mxu0 0.0
    %1829 = vmatpush2.msra.mxu0 0.0
    %1830 = vmatprep.subr.mxu0 0.0
    %1831 = vmatpush2.msra.mxu0 0.0
    %1832 = vmatprep.subr.mxu0 0.0
    %1833 = vmatpush2.msra.mxu0 0.0
    %1834 = vmatprep.subr.mxu0 0.0
    %1835 = vmatpush2.msra.mxu0 0.0
    %1836 = vmatprep.subr.mxu0 0.0
    %1837 = vmatpush2.msra.mxu0 0.0
    %1838 = vmatprep.subr.mxu0 0.0
    %1839 = vmatpush2.msra.mxu0 0.0
    %1840 = vmatprep.mubr.f32.mxu0 0.0
    %1841 = vmatmul.mubr.f32.gmra.mxu0 %v1775
    %v1842 = vpop.f32.mrf.mxu0
    %v1843 = vadd.f32 0.0, %v1842
    %v1844 = vpop.f32.mrf.mxu0
    %v1845 = vadd.f32 0.0, %v1844
    %1846 = vdwg.mxu0
    %1847 = vmatprep.subr.mxu0 %v500
    %1848 = vmatpush1.msra.mxu0 %v499
    %1849 = vmatprep.subr.mxu0 %v496
    %1850 = vmatpush1.msra.mxu0 %v495
    %1851 = vmatprep.subr.mxu0 %v492
    %1852 = vmatpush1.msra.mxu0 %v491
    %1853 = vmatprep.subr.mxu0 %v488
    %1854 = vmatpush1.msra.mxu0 %v487
    %1855 = vmatprep.subr.mxu0 %v484
    %1856 = vmatpush1.msra.mxu0 %v483
    %1857 = vmatprep.subr.mxu0 %v480
    %1858 = vmatpush1.msra.mxu0 %v479
    %1859 = vmatprep.subr.mxu0 %v476
    %1860 = vmatpush1.msra.mxu0 %v475
    %1861 = vmatprep.subr.mxu0 %v472
    %1862 = vmatpush1.msra.mxu0 %v471
    %1863 = vmatprep.subr.mxu0 %v468
    %1864 = vmatpush1.msra.mxu0 %v467
    %1865 = vmatprep.subr.mxu0 %v464
    %1866 = vmatpush1.msra.mxu0 %v463
    %1867 = vmatprep.subr.mxu0 %v460
    %1868 = vmatpush1.msra.mxu0 %v459
    %1869 = vmatprep.subr.mxu0 %v456
    %1870 = vmatpush1.msra.mxu0 %v455
    %1871 = vmatprep.subr.mxu0 %v452
    %1872 = vmatpush1.msra.mxu0 %v451
    %1873 = vmatprep.subr.mxu0 %v448
    %1874 = vmatpush1.msra.mxu0 %v447
    %1875 = vmatprep.subr.mxu0 %v444
    %1876 = vmatpush1.msra.mxu0 %v443
    %1877 = vmatprep.subr.mxu0 %v440
    %1878 = vmatpush1.msra.mxu0 %v439
    %1879 = vmatprep.subr.mxu0 0.0
    %1880 = vmatpush2.msra.mxu0 0.0
    %1881 = vmatprep.subr.mxu0 0.0
    %1882 = vmatpush2.msra.mxu0 0.0
    %1883 = vmatprep.subr.mxu0 0.0
    %1884 = vmatpush2.msra.mxu0 0.0
    %1885 = vmatprep.subr.mxu0 0.0
    %1886 = vmatpush2.msra.mxu0 0.0
    %1887 = vmatprep.subr.mxu0 0.0
    %1888 = vmatpush2.msra.mxu0 0.0
    %1889 = vmatprep.subr.mxu0 0.0
    %1890 = vmatpush2.msra.mxu0 0.0
    %1891 = vmatprep.subr.mxu0 0.0
    %1892 = vmatpush2.msra.mxu0 0.0
    %1893 = vmatprep.subr.mxu0 0.0
    %1894 = vmatpush2.msra.mxu0 0.0
    %1895 = vmatprep.subr.mxu0 0.0
    %1896 = vmatpush2.msra.mxu0 0.0
    %1897 = vmatprep.subr.mxu0 0.0
    %1898 = vmatpush2.msra.mxu0 0.0
    %1899 = vmatprep.subr.mxu0 0.0
    %1900 = vmatpush2.msra.mxu0 0.0
    %1901 = vmatprep.subr.mxu0 0.0
    %1902 = vmatpush2.msra.mxu0 0.0
    %1903 = vmatprep.subr.mxu0 0.0
    %1904 = vmatpush2.msra.mxu0 0.0
    %1905 = vmatprep.subr.mxu0 0.0
    %1906 = vmatpush2.msra.mxu0 0.0
    %1907 = vmatprep.subr.mxu0 0.0
    %1908 = vmatpush2.msra.mxu0 0.0
    %1909 = vmatprep.subr.mxu0 0.0
    %1910 = vmatpush2.msra.mxu0 0.0
    %1911 = vmatprep.mubr.f32.mxu0 0.0
    %1912 = vmatmul.mubr.f32.gmra.mxu0 %v1775
    %v1913 = vpop.f32.mrf.mxu0
    %v1914 = vadd.f32 0.0, %v1913
    %v1915 = vpop.f32.mrf.mxu0
    %v1916 = vadd.f32 0.0, %v1915
    %1917 = vdwg.mxu0
    %v1918 = vadd.f32 %v1771, %v1843
    %v1919 = vadd.f32 %v1772, %v1845
    %v1920 = vadd.f32 %v1773, %v1914
    %v1921 = vadd.f32 %v1774, %v1916
    %v1922 = vxor.u32 %v1918, 2147483648
    %v1923 = vmul.f32 %v1922, 1.442695
    %v1924 = vpow.pop %v1923
    %v1925 = vadd.f32 %v1924, 1.0
    %v1926 = vrcp.pop %v1925
    %v1927 = vmul.f32 1.0, %v1926
    %v1928 = vxor.u32 %v1919, 2147483648
    %v1929 = vmul.f32 %v1928, 1.442695
    %v1930 = vpow.pop %v1929
    %v1931 = vadd.f32 %v1930, 1.0
    %v1932 = vrcp.pop %v1931
    %v1933 = vmul.f32 1.0, %v1932
    %v1934 = vtanh.pop %v1920
    %v1935 = vxor.u32 %v1921, 2147483648
    %v1936 = vmul.f32 %v1935, 1.442695
    %v1937 = vpow.pop %v1936
    %v1938 = vadd.f32 %v1937, 1.0
    %v1939 = vrcp.pop %v1938
    %v1940 = vmul.f32 1.0, %v1939
    %v1941 = vld [vmem:[#allocation3] sm:$0xff]
    %v1942 = vmul.f32 %v1933, %v1941
    %v1943 = vmul.f32 %v1927, %v1934
    %v1944 = vadd.f32 %v1942, %v1943
    %v1945 = vtanh.pop %v1944
    %v1946 = vmul.f32 %v1940, %v1945
    %1947 = vst [vmem:[#allocation3] sm:$0xff] %v1944
    %1948 = vst [vmem:[#allocation2] sm:$0xff] %v1946
    // Predicated region
    $region46: #{tpu_custom_call.1} parent=1 // pred_check
      %p1949 = pneg %p79
    $region47: #{tpu_custom_call.1} parent=1 // pred_check_branch
      %1951 = sbr.rel (%p1949) target = $region49
    $region48: #{tpu_custom_call.1} parent=1 // pred_region
      %v1952 = vld [vmem:[#allocation2] sm:$0xff]
      %v1953 = vld [vmem:[#allocation11] sm:$0xff]
      %v1954 = vld [vmem:[#allocation11 + $0x8] sm:$0xff]
      %v1955 = vld [vmem:[#allocation11 + $0x10] sm:$0xff]
      %v1956 = vld [vmem:[#allocation11 + $0x18] sm:$0xff]
      %v1957 = vld [vmem:[#allocation11 + $0x20] sm:$0xff]
      %v1958 = vld [vmem:[#allocation11 + $0x28] sm:$0xff]
      %v1959 = vld [vmem:[#allocation11 + $0x30] sm:$0xff]
      %v1960 = vld [vmem:[#allocation11 + $0x38] sm:$0xff]
      %v1961 = vld [vmem:[#allocation11 + $0x40] sm:$0xff]
      %v1962 = vld [vmem:[#allocation11 + $0x48] sm:$0xff]
      %v1963 = vld [vmem:[#allocation11 + $0x50] sm:$0xff]
      %v1964 = vld [vmem:[#allocation11 + $0x58] sm:$0xff]
      %v1965 = vld [vmem:[#allocation11 + $0x60] sm:$0xff]
      %v1966 = vld [vmem:[#allocation11 + $0x68] sm:$0xff]
      %v1967 = vld [vmem:[#allocation11 + $0x70] sm:$0xff]
      %v1968 = vld [vmem:[#allocation11 + $0x78] sm:$0xff]
      %v1969 = vld [vmem:[%s5] sm:$0x1]
      %v1971 = vlaneseq
      %v1972 = vshrl.u32 %v1971, 7
      %v1973 = vsub.s32 0, %v1972
      %v1974 = vrot.slane %v1969, %v1973
      %1976 = vmatprep.subr.mxu0 0.0
      %1977 = vmatpush1.msra.mxu0 %v1968
      %1978 = vmatprep.subr.mxu0 0.0
      %1979 = vmatpush1.msra.mxu0 %v1967
      %1980 = vmatprep.subr.mxu0 0.0
      %1981 = vmatpush1.msra.mxu0 %v1966
      %1982 = vmatprep.subr.mxu0 0.0
      %1983 = vmatpush1.msra.mxu0 %v1965
      %1984 = vmatprep.subr.mxu0 0.0
      %1985 = vmatpush1.msra.mxu0 %v1964
      %1986 = vmatprep.subr.mxu0 0.0
      %1987 = vmatpush1.msra.mxu0 %v1963
      %1988 = vmatprep.subr.mxu0 0.0
      %1989 = vmatpush1.msra.mxu0 %v1962
      %1990 = vmatprep.subr.mxu0 0.0
      %1991 = vmatpush1.msra.mxu0 %v1961
      %1992 = vmatprep.subr.mxu0 0.0
      %1993 = vmatpush1.msra.mxu0 %v1960
      %1994 = vmatprep.subr.mxu0 0.0
      %1995 = vmatpush1.msra.mxu0 %v1959
      %1996 = vmatprep.subr.mxu0 0.0
      %1997 = vmatpush1.msra.mxu0 %v1958
      %1998 = vmatprep.subr.mxu0 0.0
      %1999 = vmatpush1.msra.mxu0 %v1957
      %2000 = vmatprep.subr.mxu0 0.0
      %2001 = vmatpush1.msra.mxu0 %v1956
      %2002 = vmatprep.subr.mxu0 0.0
      %2003 = vmatpush1.msra.mxu0 %v1955
      %2004 = vmatprep.subr.mxu0 0.0
      %2005 = vmatpush1.msra.mxu0 %v1954
      %2006 = vmatprep.subr.mxu0 0.0
      %2007 = vmatpush1.msra.mxu0 %v1953
      %2008 = vmatprep.subr.mxu0 0.0
      %2009 = vmatpush2.msra.mxu0 0.0
      %2010 = vmatprep.subr.mxu0 0.0
      %2011 = vmatpush2.msra.mxu0 0.0
      %2012 = vmatprep.subr.mxu0 0.0
      %2013 = vmatpush2.msra.mxu0 0.0
      %2014 = vmatprep.subr.mxu0 0.0
      %2015 = vmatpush2.msra.mxu0 0.0
      %2016 = vmatprep.subr.mxu0 0.0
      %2017 = vmatpush2.msra.mxu0 0.0
      %2018 = vmatprep.subr.mxu0 0.0
      %2019 = vmatpush2.msra.mxu0 0.0
      %2020 = vmatprep.subr.mxu0 0.0
      %2021 = vmatpush2.msra.mxu0 0.0
      %2022 = vmatprep.subr.mxu0 0.0
      %2023 = vmatpush2.msra.mxu0 0.0
      %2024 = vmatprep.subr.mxu0 0.0
      %2025 = vmatpush2.msra.mxu0 0.0
      %2026 = vmatprep.subr.mxu0 0.0
      %2027 = vmatpush2.msra.mxu0 0.0
      %2028 = vmatprep.subr.mxu0 0.0
      %2029 = vmatpush2.msra.mxu0 0.0
      %2030 = vmatprep.subr.mxu0 0.0
      %2031 = vmatpush2.msra.mxu0 0.0
      %2032 = vmatprep.subr.mxu0 0.0
      %2033 = vmatpush2.msra.mxu0 0.0
      %2034 = vmatprep.subr.mxu0 0.0
      %2035 = vmatpush2.msra.mxu0 0.0
      %2036 = vmatprep.subr.mxu0 0.0
      %2037 = vmatpush2.msra.mxu0 0.0
      %2038 = vmatprep.subr.mxu0 0.0
      %2039 = vmatpush2.msra.mxu0 0.0
      %2040 = vmatprep.mubr.f32.mxu0 0.0
      %2041 = vmatmul.mubr.f32.gmra.mxu0 %v1952
      %v2042 = vpop.f32.mrf.mxu0
      %v2043 = vadd.f32 %v1974, %v2042
      %v2044 = vpop.f32.mrf.mxu0
      %2045 = vdwg.mxu0
      %2046 = vst [vmem:[#allocation13] sm:$0xff] %v2043
    $region49: #{tpu_custom_call.1} parent=1 // pred_fallthru
      _
    // Predicated region
    $region50: #{tpu_custom_call.1} parent=1 // pred_check
      _
    $region51: #{tpu_custom_call.1} parent=1 // pred_check_branch
      %2048 = sbr.rel (0) target = $region53
    $region52: #{tpu_custom_call.1} parent=1 // pred_region
      %s2050 = ssub.s32 128, 128
      %2051 = vsyncadd [#allocation7], %s2050
      %s2053 = sshll.u32 [#allocation13], 4
      %s2054 = int_to_ptr.vmem [resolvable:$true] %s2053
      %2056 = dma.vmem_to_hbm [thread:$0]  %s2054, 128, %s6, [#allocation7]
    $region53: #{tpu_custom_call.1} parent=1 // pred_fallthru
      _
    // Predicated region
    $region54: #{tpu_custom_call.1} parent=1 // pred_check
      _
    $region55: #{tpu_custom_call.1} parent=1 // pred_check_branch
      %2058 = sbr.rel (0) target = $region57
    $region56: #{tpu_custom_call.1} parent=1 // pred_region
      %2059 = dma.done [#allocation7], 128
    $region57: #{tpu_custom_call.1} parent=1 // pred_fallthru
      _
    %2060 = vsyncpa [#allocation6], 1
    %2061 = vsyncpa [#allocation9], 1
    %2062 = vsyncpa [#allocation12], 1
    %2063 = vsyncpa [#allocation7], 1

</llo_original>
